<compile_context>
chip_gen: v7x
topology: tpu7x:2x2x1
jax: 0.10.0
libtpu: 0.0.40
codegen_flags: <defaults>
</compile_context>

<pallas_src>
import jax
import jax.numpy as jnp
from jax import lax
from jax.experimental import pallas as pl
from jax.experimental.pallas import tpu as pltpu


# ---------------------------------------------------------------------------
# Per-generation scoped-VMEM budget: ~half of physical VMEM, clamped to
# [32, 96] MiB  (v5e/v6e: 128 MiB -> 64 MiB; v7x: 64 MiB -> 32 MiB).
# ---------------------------------------------------------------------------
def _pick_vmem_limit():
    try:
        cap = int(pltpu.get_tpu_info().vmem_capacity_bytes)
        return int(max(32 << 20, min(96 << 20, cap // 2)))
    except Exception:  # unknown chip / query unavailable -> safe default
        return 32 << 20


_VMEM_LIMIT = _pick_vmem_limit()


# ---------------------------------------------------------------------------
# pltpu.roll rotation-direction guard.  One tiny one-shot kernel at import
# time pins down the convention (jnp.roll-like: out[k] == in[(k - shift) % n])
# so the tap shifts below stay correct across jax / Mosaic versions.
# ---------------------------------------------------------------------------
def _probe_roll_is_jnp_like():
    def kern(x_ref, o_ref):
        o_ref[...] = pltpu.roll(x_ref[...], 1, 1)

    try:
        x = jnp.tile(jnp.arange(128, dtype=jnp.int32)[None, :], (8, 1))
        y = pl.pallas_call(
            kern, out_shape=jax.ShapeDtypeStruct((8, 128), jnp.int32))(x)
        return bool(int(jax.device_get(y)[0, 1]) == 0)
    except Exception:
        return True  # jnp.roll convention (the documented/tested behaviour)


_ROLL_IS_JNP_LIKE = _probe_roll_is_jnp_like()


def _roll_shift(off, size):
    """Shift such that pltpu.roll(x, shift, -1)[..., k] == x[..., (k+off) % size]."""
    return ((-off) if _ROLL_IS_JNP_LIKE else off) % size


# ---------------------------------------------------------------------------
# Kernel 1: ConvTranspose2d(kernel=2, stride=2) as a lane-dense matmul.
#   Rows of the packed weight are ordered (di, dj, co); lanes carry H*W.
# ---------------------------------------------------------------------------
def _deconv_kernel(x_ref, w_ref, b_ref, o_ref):
    # x_ref: (1, Cin, TS)   w_ref: (4*Cup, Cin)   b_ref: (4*Cup, 1)
    # o_ref: (1, 4*Cup, TS)
    y = jnp.dot(w_ref[...], x_ref[0], preferred_element_type=jnp.float32)
    o_ref[0] = (y + b_ref[...]).astype(o_ref.dtype)


def _spatial_tiling(hw, target=8192):
    """Pick (tile, padded_hw).  Large lane-dense tiles (>=512 lanes reach >=85%
    of the HBM roofline; per-grid-step overhead ~0.35us).  If hw has no
    128-multiple divisor <= target, pad the flattened spatial axis so every
    grid step still gets a full lane-dense tile (zero lanes are inert here)."""
    if hw <= target:
        return hw, hw
    best = 0
    t = 128
    while t <= target:
        if hw % t == 0:
            best = t
        t += 128
    if best:
        return best, hw
    padded = ((hw + target - 1) // target) * target
    return target, padded


def conv_transpose_2x2_s2(x, wd, bd):
    """x: (N, Cin, H, W) NCHW.  wd: (4*Cup, Cin), bd: (4*Cup, 1) prepacked.
    Returns the upsampled tensor (N, Cup, 2H, 2W)."""
    N, Cin, H, W = x.shape
    cup = wd.shape[0] // 4
    HW = H * W
    ts, HWp = _spatial_tiling(HW)
    x_flat = x.reshape(N, Cin, HW)  # free (trailing-dim merge)
    if HWp != HW:
        x_flat = jnp.pad(x_flat, ((0, 0), (0, 0), (0, HWp - HW)))
    n_s = HWp // ts

    flops = 2 * N * HW * Cin * 4 * cup
    bytes_accessed = 4 * (N * Cin * HW + N * 4 * cup * HW + wd.size + bd.size)

    planes = pl.pallas_call(
        _deconv_kernel,
        out_shape=jax.ShapeDtypeStruct((N, 4 * cup, HWp), x.dtype),
        grid=(N, n_s),
        in_specs=[
            pl.BlockSpec((1, Cin, ts), lambda n, s: (n, 0, s)),
            pl.BlockSpec((4 * cup, Cin), lambda n, s: (0, 0)),
            pl.BlockSpec((4 * cup, 1), lambda n, s: (0, 0)),
        ],
        out_specs=pl.BlockSpec((1, 4 * cup, ts), lambda n, s: (n, 0, s)),
        compiler_params=pltpu.CompilerParams(
            dimension_semantics=("parallel", "parallel"),
            vmem_limit_bytes=_VMEM_LIMIT),
        cost_estimate=pl.CostEstimate(
            flops=flops, transcendentals=0, bytes_accessed=bytes_accessed),
    )(x_flat, wd, bd)

    if HWp != HW:
        planes = planes[..., :HW]

    # TODO(synk): remaining XLA relayout pass -- pixel interleave
    # planes[(di*2+dj)*Cup + co, h*W + w] -> up[co, 2h+di, 2w+dj].
    up = planes.reshape(N, 2, 2, cup, H, W)
    up = jnp.transpose(up, (0, 3, 4, 1, 5, 2)).reshape(N, cup, 2 * H, 2 * W)
    return up


# ---------------------------------------------------------------------------
# Kernel 2: fused [channel-concat +] 3x3 conv + bias + ReLU  ->  3x3 conv +
#           bias + ReLU, all in one grid step (whole image, lane-dense).
#   Each tap is a pltpu.roll lane shift (XLU) of the flattened (C, H*W) image,
#   masked by in-kernel iota comparisons (covers borders and the roll wrap).
#   All taps are stacked along the contraction dim -> one MXU matmul per conv;
#   the intermediate y1 never leaves vregs/VMEM.
# ---------------------------------------------------------------------------
def _make_block_up_kernel(H, W):
    HW = H * W
    w_pow2 = (W & (W - 1)) == 0

    def taps_stack(x, lane, col):
        """(C, HW) -> (9*C, HW): tap-major stack of shifted+masked copies."""
        pieces = []
        for t in range(9):
            dh, dw = t // 3 - 1, t % 3 - 1
            off = dh * W + dw
            shifted = x if off == 0 else pltpu.roll(x, _roll_shift(off, HW), 1)
            conds = []
            # Vertical validity (also zeroes the lanes wrapped by the roll).
            if dh < 0:
                conds.append(lane >= (-dh) * W)
            if dh > 0:
                conds.append(lane < (H - dh) * W)
            # Horizontal validity (wrapped row borders).
            if dw < 0:
                conds.append(col >= -dw)
            if dw > 0:
                conds.append(col < W - dw)
            if conds:
                m = conds[0]
                for c in conds[1:]:
                    m = jnp.logical_and(m, c)
                shifted = shifted * m.astype(shifted.dtype)
            pieces.append(shifted)
        return jnp.concatenate(pieces, axis=0)

    def kernel(up_ref, skip_ref, w1_ref, b1_ref, w2_ref, b2_ref, o_ref):
        # Hoisted once; shared by both convs (JAX does not CSE broadcasts).
        lane = lax.broadcasted_iota(jnp.int32, (1, HW), 1)
        if w_pow2:
            col = jnp.bitwise_and(lane, W - 1)
        else:
            # TODO(synk): relies on vector int-rem lowering; pass a precomputed
            # column map instead if this ever fails for non-power-of-two W.
            col = lane % W

        # conv1: fused channel-concat + 3x3 SAME conv + bias + ReLU.
        xcat = jnp.concatenate([up_ref[0], skip_ref[0]], axis=0)  # (Cin_tot, HW)
        y1 = jnp.dot(w1_ref[...], taps_stack(xcat, lane, col),
                     preferred_element_type=jnp.float32)
        y1 = jnp.maximum(y1 + b1_ref[...], 0.0)                   # (Cout, HW) f32

        # conv2 on the VMEM/vreg-resident intermediate (no HBM round trip).
        y2 = jnp.dot(w2_ref[...], taps_stack(y1, lane, col),
                     preferred_element_type=jnp.float32)
        y2 = jnp.maximum(y2 + b2_ref[...], 0.0)
        o_ref[0] = y2.astype(o_ref.dtype)

    return kernel


def block_up_convs(up, skip, w1p, b1, w2p, b2):
    """Fused: ReLU(conv3x3(ReLU(conv3x3(cat(up, skip)) + b1)) + b2).
    up: (N, Cup, Hb, Wb), skip: (N, Cs, Hb, Wb) -> (N, Cout, Hb, Wb)."""
    N, c_up, Hb, Wb = up.shape
    c_skip = skip.shape[1]
    c_out = b1.shape[0]
    HWb = Hb * Wb

    up_flat = up.reshape(N, c_up, HWb)        # free (trailing-dim merge)
    skip_flat = skip.reshape(N, c_skip, HWb)  # free

    kernel = _make_block_up_kernel(Hb, Wb)

    flops = 2 * N * HWb * 9 * c_out * (c_up + c_skip + c_out)
    bytes_accessed = 4 * (N * (c_up + c_skip + c_out) * HWb
                          + w1p.size + w2p.size + 2 * c_out)

    out_flat = pl.pallas_call(
        kernel,
        out_shape=jax.ShapeDtypeStruct((N, c_out, HWb), up.dtype),
        grid=(N,),
        in_specs=[
            pl.BlockSpec((1, c_up, HWb), lambda n: (n, 0, 0)),
            pl.BlockSpec((1, c_skip, HWb), lambda n: (n, 0, 0)),
            pl.BlockSpec(w1p.shape, lambda n: (0, 0)),
            pl.BlockSpec((c_out, 1), lambda n: (0, 0)),
            pl.BlockSpec(w2p.shape, lambda n: (0, 0)),
            pl.BlockSpec((c_out, 1), lambda n: (0, 0)),
        ],
        out_specs=pl.BlockSpec((1, c_out, HWb), lambda n: (n, 0, 0)),
        compiler_params=pltpu.CompilerParams(
            dimension_semantics=("parallel",),
            vmem_limit_bytes=_VMEM_LIMIT),
        cost_estimate=pl.CostEstimate(
            flops=flops, transcendentals=0, bytes_accessed=bytes_accessed),
    )(up_flat, skip_flat, w1p, b1, w2p, b2)

    return out_flat.reshape(N, c_out, Hb, Wb)  # free (trailing-dim split)


# ---------------------------------------------------------------------------
# Parameters (torch layouts) and one-time prepacking into kernel layouts.
# ---------------------------------------------------------------------------
def init_params(key, in_channels, out_channels):
    ks = jax.random.split(key, 6)
    return {
        # ConvTranspose2d weight, torch layout (Cin, Cout, kH, kW)
        "up_w": jax.random.normal(ks[0], (in_channels, in_channels, 2, 2),
                                  jnp.float32) * 0.1,
        "up_b": jax.random.normal(ks[1], (in_channels,), jnp.float32) * 0.1,
        # Conv2d weights, torch layout OIHW
        "c1_w": jax.random.normal(ks[2], (out_channels, in_channels * 2, 3, 3),
                                  jnp.float32) * 0.1,
        "c1_b": jax.random.normal(ks[3], (out_channels,), jnp.float32) * 0.1,
        "c2_w": jax.random.normal(ks[4], (out_channels, out_channels, 3, 3),
                                  jnp.float32) * 0.1,
        "c2_b": jax.random.normal(ks[5], (out_channels,), jnp.float32) * 0.1,
    }


def prepare_params(params):
    """One-time repacking of torch-layout weights into the kernel layouts."""
    cin = params["up_w"].shape[0]
    cup = params["up_w"].shape[1]

    # ConvTranspose2d: rows ordered (di, dj, co), columns ci.
    wd = jnp.transpose(params["up_w"], (2, 3, 1, 0)).reshape(4 * cup, cin)
    bd = jnp.tile(params["up_b"], 4)[:, None]

    def pack_k(w_oihw):
        # OIHW -> (O, 9*I) with column index = tap*(I) + in_channel, matching
        # the tap-major stacked input built in the kernel.
        o, i = w_oihw.shape[0], w_oihw.shape[1]
        return jnp.transpose(w_oihw, (0, 2, 3, 1)).reshape(o, 9 * i)

    return {
        "up_wd": wd, "up_bd": bd,
        "c1_wp": pack_k(params["c1_w"]),   # (Cout, 9*(Cup+Cskip)); channel
        "c1_b": params["c1_b"][:, None],   # order matches cat([up, skip]).
        "c2_wp": pack_k(params["c2_w"]),   # (Cout, 9*Cout)
        "c2_b": params["c2_b"][:, None],
    }


# ---------------------------------------------------------------------------
# ConvBlockUp forward (NCHW in / NCHW out, like the PyTorch module)
# ---------------------------------------------------------------------------
def conv_block_up(prep, x, skip):
    """x: (N, Cin, H, W), skip: (N, Cin, 2H, 2W) -> (N, Cout, 2H, 2W)."""
    up = conv_transpose_2x2_s2(x, prep["up_wd"], prep["up_bd"])
    # torch: cat([up, skip], dim=1) -> Dropout -> conv1 -> ReLU -> conv2 -> ReLU.
    # The concat is fused into conv1; Dropout is identity in eval mode.
    return block_up_convs(up, skip, prep["c1_wp"], prep["c1_b"],
                          prep["c2_wp"], prep["c2_b"])


# ---------------------------------------------------------------------------
# Pure-JAX reference for verification
# ---------------------------------------------------------------------------
def reference(params, x, skip):
    N, _, H, W = x.shape
    cup = params["up_w"].shape[1]
    t = jnp.einsum("nchw,cokl->nohkwl", x, params["up_w"])
    up = t.reshape(N, cup, 2 * H, 2 * W) + params["up_b"][None, :, None, None]
    xin = jnp.concatenate([up, skip], axis=1)

    def conv(a, w, b):
        y = lax.conv_general_dilated(
            a, w, (1, 1), "SAME",
            dimension_numbers=("NCHW", "OIHW", "NCHW"))
        return jnp.maximum(y + b[None, :, None, None], 0.0)

    y = conv(xin, params["c1_w"], params["c1_b"])
    y = conv(y, params["c2_w"], params["c2_b"])
    return y


if __name__ == "__main__":
    key = jax.random.PRNGKey(0)
    in_channels, out_channels = 4, 8
    N, H, W = 2, 16, 16

    kx, ks, kp = jax.random.split(key, 3)
    x = jax.random.normal(kx, (N, in_channels, H, W), jnp.float32)
    skip = jax.random.normal(ks, (N, in_channels, 2 * H, 2 * W), jnp.float32)
    params = init_params(kp, in_channels, out_channels)
    prep = prepare_params(params)

    fwd = jax.jit(conv_block_up)
    out = jax.block_until_ready(fwd(prep, x, skip))
    ref = reference(params, x, skip)

    assert out.shape == (N, out_channels, 2 * H, 2 * W), out.shape
    max_err = float(jnp.max(jnp.abs(out - ref)))
    assert jnp.allclose(out, ref, rtol=2e-4, atol=2e-4), max_err
    print("KERNEL_OK")
</pallas_src>

<mosaic_0001>
module attributes {stable_mosaic.version = 11 : i64} {
  func.func @kern(%arg0: memref<8x128xi32, #tpu.memory_space<vmem>>, %arg1: memref<8x128xi32, #tpu.memory_space<vmem>>) attributes {dimension_semantics = [], scalar_prefetch = 0 : i64, scratch_operands = 0 : i64, tpu.core_type = #tpu.core_type<tc>} {
    %c0 = arith.constant 0 : index
    %c0_0 = arith.constant 0 : index
    %0 = vector.load %arg0[%c0, %c0_0] : memref<8x128xi32, #tpu.memory_space<vmem>>, vector<8x128xi32>
    %c1_i32 = arith.constant 1 : i32
    %1 = tpu.dynamic_rotate %0 by %c1_i32 dim 1 : vector<8x128xi32>, i32 -> vector<8x128xi32>
    %c0_1 = arith.constant 0 : index
    %c0_2 = arith.constant 0 : index
    %2 = vector.load %arg1[%c0_1, %c0_2] : memref<8x128xi32, #tpu.memory_space<vmem>>, vector<8x128xi32>
    tpu.vector_store %arg1[%c0_1, %c0_2], %1 {strides = array<i32>} : memref<8x128xi32, #tpu.memory_space<vmem>>, vector<8x128xi32>,
    return
  }
}

module attributes {stable_mosaic.version = 11 : i64} {
  func.func @_deconv_kernel(%arg0: i32, %arg1: i32, %arg2: memref<1x4x256xf32, #tpu.memory_space<vmem>>, %arg3: memref<16x4xf32, #tpu.memory_space<vmem>>, %arg4: memref<16x1xf32, #tpu.memory_space<vmem>>, %arg5: memref<1x16x256xf32, #tpu.memory_space<vmem>>) attributes {dimension_semantics = [#tpu.dimension_semantics<parallel>, #tpu.dimension_semantics<parallel>], iteration_bounds = array<i64: 2, 1>, scalar_prefetch = 0 : i64, scratch_operands = 0 : i64, tpu.core_type = #tpu.core_type<tc>, window_params = [{transform_indices = @transform_0, window_bounds = array<i64: 1, 4, 256>}, {pipeline_mode = #tpu.pipeline_mode<synchronous>, transform_indices = @transform_1, window_bounds = array<i64: 16, 4>}, {pipeline_mode = #tpu.pipeline_mode<synchronous>, transform_indices = @transform_2, window_bounds = array<i64: 16, 1>}, {transform_indices = @transform_3, window_bounds = array<i64: 1, 16, 256>}]} {
    %c0 = arith.constant 0 : index
    %c0_0 = arith.constant 0 : index
    %0 = vector.load %arg3[%c0, %c0_0] : memref<16x4xf32, #tpu.memory_space<vmem>>, vector<16x4xf32>
    %c0_1 = arith.constant 0 : index
    %c0_2 = arith.constant 0 : index
    %c0_3 = arith.constant 0 : index
    %1 = vector.load %arg2[%c0_1, %c0_2, %c0_3] : memref<1x4x256xf32, #tpu.memory_space<vmem>>, vector<1x4x256xf32>
    %2 = vector.shape_cast %1 : vector<1x4x256xf32> to vector<4x256xf32>
    %cst = arith.constant dense<0.000000e+00> : vector<16x256xf32>
    %3 = tpu.matmul %0, %2, %cst {dimension_numbers = #tpu.dot_dimension_numbers<[1], [0], [0], [1], [0, 0, 1, 1], [], []>} : vector<16x4xf32>, vector<4x256xf32>, vector<16x256xf32> -> vector<16x256xf32>
    %c0_4 = arith.constant 0 : index
    %c0_5 = arith.constant 0 : index
    %4 = vector.load %arg4[%c0_4, %c0_5] : memref<16x1xf32, #tpu.memory_space<vmem>>, vector<16x1xf32>
    %5 = vector.broadcast %4 : vector<16x1xf32> to vector<16x256xf32>
    %6 = arith.addf %3, %5 : vector<16x256xf32>
    %c0_6 = arith.constant 0 : index
    %c0_7 = arith.constant 0 : index
    %c0_8 = arith.constant 0 : index
    %7 = vector.load %arg5[%c0_6, %c0_7, %c0_8] : memref<1x16x256xf32, #tpu.memory_space<vmem>>, vector<1x16x256xf32>
    %8 = vector.shape_cast %7 : vector<1x16x256xf32> to vector<16x256xf32>
    %9 = vector.shape_cast %6 : vector<16x256xf32> to vector<1x16x256xf32>
    tpu.vector_store %arg5[%c0_6, %c0_7, %c0_8], %9 {strides = array<i32>} : memref<1x16x256xf32, #tpu.memory_space<vmem>>, vector<1x16x256xf32>,
    return
  }
  func.func @transform_0(%arg0: i32, %arg1: i32) -> (i32, i32, i32) {
    %c0_i32 = arith.constant 0 : i32
    %c0_i32_0 = arith.constant 0 : i32
    return %arg0, %c0_i32, %arg1 : i32, i32, i32
  }
  func.func @transform_1(%arg0: i32, %arg1: i32) -> (i32, i32) {
    %c0_i32 = arith.constant 0 : i32
    %c0_i32_0 = arith.constant 0 : i32
    %c0_i32_1 = arith.constant 0 : i32
    return %c0_i32, %c0_i32_0 : i32, i32
  }
  func.func @transform_2(%arg0: i32, %arg1: i32) -> (i32, i32) {
    %c0_i32 = arith.constant 0 : i32
    %c0_i32_0 = arith.constant 0 : i32
    %c0_i32_1 = arith.constant 0 : i32
    return %c0_i32, %c0_i32_0 : i32, i32
  }
  func.func @transform_3(%arg0: i32, %arg1: i32) -> (i32, i32, i32) {
    %c0_i32 = arith.constant 0 : i32
    %c0_i32_0 = arith.constant 0 : i32
    return %arg0, %c0_i32, %arg1 : i32, i32, i32
  }
}

module attributes {stable_mosaic.version = 11 : i64} {
  func.func @kernel(%arg0: i32, %arg1: memref<1x4x1024xf32, #tpu.memory_space<vmem>>, %arg2: memref<1x4x1024xf32, #tpu.memory_space<vmem>>, %arg3: memref<8x72xf32, #tpu.memory_space<vmem>>, %arg4: memref<8x1xf32, #tpu.memory_space<vmem>>, %arg5: memref<8x72xf32, #tpu.memory_space<vmem>>, %arg6: memref<8x1xf32, #tpu.memory_space<vmem>>, %arg7: memref<1x8x1024xf32, #tpu.memory_space<vmem>>) attributes {dimension_semantics = [#tpu.dimension_semantics<parallel>], iteration_bounds = array<i64: 2>, scalar_prefetch = 0 : i64, scratch_operands = 0 : i64, tpu.core_type = #tpu.core_type<tc>, window_params = [{transform_indices = @transform_0, window_bounds = array<i64: 1, 4, 1024>}, {transform_indices = @transform_1, window_bounds = array<i64: 1, 4, 1024>}, {pipeline_mode = #tpu.pipeline_mode<synchronous>, transform_indices = @transform_2, window_bounds = array<i64: 8, 72>}, {pipeline_mode = #tpu.pipeline_mode<synchronous>, transform_indices = @transform_3, window_bounds = array<i64: 8, 1>}, {pipeline_mode = #tpu.pipeline_mode<synchronous>, transform_indices = @transform_4, window_bounds = array<i64: 8, 72>}, {pipeline_mode = #tpu.pipeline_mode<synchronous>, transform_indices = @transform_5, window_bounds = array<i64: 8, 1>}, {transform_indices = @transform_6, window_bounds = array<i64: 1, 8, 1024>}]} {
    %0 = tpu.iota {dimensions = array<i32: 1>} : vector<1x1024xi32>
    %c31_i32 = arith.constant 31 : i32
    %1 = vector.broadcast %c31_i32 : i32 to vector<1x1024xi32>
    %2 = arith.andi %0, %1 : vector<1x1024xi32>
    %c0 = arith.constant 0 : index
    %c0_0 = arith.constant 0 : index
    %c0_1 = arith.constant 0 : index
    %3 = vector.load %arg1[%c0, %c0_0, %c0_1] : memref<1x4x1024xf32, #tpu.memory_space<vmem>>, vector<1x4x1024xf32>
    %4 = vector.shape_cast %3 : vector<1x4x1024xf32> to vector<4x1024xf32>
    %c0_2 = arith.constant 0 : index
    %c0_3 = arith.constant 0 : index
    %c0_4 = arith.constant 0 : index
    %5 = vector.load %arg2[%c0_2, %c0_3, %c0_4] : memref<1x4x1024xf32, #tpu.memory_space<vmem>>, vector<1x4x1024xf32>
    %6 = vector.shape_cast %5 : vector<1x4x1024xf32> to vector<4x1024xf32>
    %7 = tpu.concatenate %4, %6 in 0 : vector<4x1024xf32>, vector<4x1024xf32> -> vector<8x1024xf32>
    %c0_5 = arith.constant 0 : index
    %c0_6 = arith.constant 0 : index
    %8 = vector.load %arg3[%c0_5, %c0_6] : memref<8x72xf32, #tpu.memory_space<vmem>>, vector<8x72xf32>
    %c33_i32 = arith.constant 33 : i32
    %9 = tpu.dynamic_rotate %7 by %c33_i32 dim 1 : vector<8x1024xf32>, i32 -> vector<8x1024xf32>
    %c32_i32 = arith.constant 32 : i32
    %10 = vector.broadcast %c32_i32 : i32 to vector<1x1024xi32>
    %11 = arith.cmpi sge, %0, %10 : vector<1x1024xi32>
    %c1_i32 = arith.constant 1 : i32
    %12 = vector.broadcast %c1_i32 : i32 to vector<1x1024xi32>
    %13 = arith.cmpi sge, %2, %12 : vector<1x1024xi32>
    %14 = arith.andi %11, %13 : vector<1x1024xi1>
    %15 = arith.extui %14 : vector<1x1024xi1> to vector<1x1024xi32>
    %16 = arith.sitofp %15 : vector<1x1024xi32> to vector<1x1024xf32>
    %17 = vector.broadcast %16 : vector<1x1024xf32> to vector<8x1024xf32>
    %18 = arith.mulf %9, %17 : vector<8x1024xf32>
    %c32_i32_7 = arith.constant 32 : i32
    %19 = tpu.dynamic_rotate %7 by %c32_i32_7 dim 1 : vector<8x1024xf32>, i32 -> vector<8x1024xf32>
    %c32_i32_8 = arith.constant 32 : i32
    %20 = vector.broadcast %c32_i32_8 : i32 to vector<1x1024xi32>
    %21 = arith.cmpi sge, %0, %20 : vector<1x1024xi32>
    %22 = arith.extui %21 : vector<1x1024xi1> to vector<1x1024xi32>
    %23 = arith.sitofp %22 : vector<1x1024xi32> to vector<1x1024xf32>
    %24 = vector.broadcast %23 : vector<1x1024xf32> to vector<8x1024xf32>
    %25 = arith.mulf %19, %24 : vector<8x1024xf32>
    %c31_i32_9 = arith.constant 31 : i32
    %26 = tpu.dynamic_rotate %7 by %c31_i32_9 dim 1 : vector<8x1024xf32>, i32 -> vector<8x1024xf32>
    %c32_i32_10 = arith.constant 32 : i32
    %27 = vector.broadcast %c32_i32_10 : i32 to vector<1x1024xi32>
    %28 = arith.cmpi sge, %0, %27 : vector<1x1024xi32>
    %c31_i32_11 = arith.constant 31 : i32
    %29 = vector.broadcast %c31_i32_11 : i32 to vector<1x1024xi32>
    %30 = arith.cmpi slt, %2, %29 : vector<1x1024xi32>
    %31 = arith.andi %28, %30 : vector<1x1024xi1>
    %32 = arith.extui %31 : vector<1x1024xi1> to vector<1x1024xi32>
    %33 = arith.sitofp %32 : vector<1x1024xi32> to vector<1x1024xf32>
    %34 = vector.broadcast %33 : vector<1x1024xf32> to vector<8x1024xf32>
    %35 = arith.mulf %26, %34 : vector<8x1024xf32>
    %c1_i32_12 = arith.constant 1 : i32
    %36 = tpu.dynamic_rotate %7 by %c1_i32_12 dim 1 : vector<8x1024xf32>, i32 -> vector<8x1024xf32>
    %c1_i32_13 = arith.constant 1 : i32
    %37 = vector.broadcast %c1_i32_13 : i32 to vector<1x1024xi32>
    %38 = arith.cmpi sge, %2, %37 : vector<1x1024xi32>
    %39 = arith.extui %38 : vector<1x1024xi1> to vector<1x1024xi32>
    %40 = arith.sitofp %39 : vector<1x1024xi32> to vector<1x1024xf32>
    %41 = vector.broadcast %40 : vector<1x1024xf32> to vector<8x1024xf32>
    %42 = arith.mulf %36, %41 : vector<8x1024xf32>
    %c1023_i32 = arith.constant 1023 : i32
    %43 = tpu.dynamic_rotate %7 by %c1023_i32 dim 1 : vector<8x1024xf32>, i32 -> vector<8x1024xf32>
    %c31_i32_14 = arith.constant 31 : i32
    %44 = vector.broadcast %c31_i32_14 : i32 to vector<1x1024xi32>
    %45 = arith.cmpi slt, %2, %44 : vector<1x1024xi32>
    %46 = arith.extui %45 : vector<1x1024xi1> to vector<1x1024xi32>
    %47 = arith.sitofp %46 : vector<1x1024xi32> to vector<1x1024xf32>
    %48 = vector.broadcast %47 : vector<1x1024xf32> to vector<8x1024xf32>
    %49 = arith.mulf %43, %48 : vector<8x1024xf32>
    %c993_i32 = arith.constant 993 : i32
    %50 = tpu.dynamic_rotate %7 by %c993_i32 dim 1 : vector<8x1024xf32>, i32 -> vector<8x1024xf32>
    %c992_i32 = arith.constant 992 : i32
    %51 = vector.broadcast %c992_i32 : i32 to vector<1x1024xi32>
    %52 = arith.cmpi slt, %0, %51 : vector<1x1024xi32>
    %c1_i32_15 = arith.constant 1 : i32
    %53 = vector.broadcast %c1_i32_15 : i32 to vector<1x1024xi32>
    %54 = arith.cmpi sge, %2, %53 : vector<1x1024xi32>
    %55 = arith.andi %52, %54 : vector<1x1024xi1>
    %56 = arith.extui %55 : vector<1x1024xi1> to vector<1x1024xi32>
    %57 = arith.sitofp %56 : vector<1x1024xi32> to vector<1x1024xf32>
    %58 = vector.broadcast %57 : vector<1x1024xf32> to vector<8x1024xf32>
    %59 = arith.mulf %50, %58 : vector<8x1024xf32>
    %c992_i32_16 = arith.constant 992 : i32
    %60 = tpu.dynamic_rotate %7 by %c992_i32_16 dim 1 : vector<8x1024xf32>, i32 -> vector<8x1024xf32>
    %c992_i32_17 = arith.constant 992 : i32
    %61 = vector.broadcast %c992_i32_17 : i32 to vector<1x1024xi32>
    %62 = arith.cmpi slt, %0, %61 : vector<1x1024xi32>
    %63 = arith.extui %62 : vector<1x1024xi1> to vector<1x1024xi32>
    %64 = arith.sitofp %63 : vector<1x1024xi32> to vector<1x1024xf32>
    %65 = vector.broadcast %64 : vector<1x1024xf32> to vector<8x1024xf32>
    %66 = arith.mulf %60, %65 : vector<8x1024xf32>
    %c991_i32 = arith.constant 991 : i32
    %67 = tpu.dynamic_rotate %7 by %c991_i32 dim 1 : vector<8x1024xf32>, i32 -> vector<8x1024xf32>
    %c992_i32_18 = arith.constant 992 : i32
    %68 = vector.broadcast %c992_i32_18 : i32 to vector<1x1024xi32>
    %69 = arith.cmpi slt, %0, %68 : vector<1x1024xi32>
    %c31_i32_19 = arith.constant 31 : i32
    %70 = vector.broadcast %c31_i32_19 : i32 to vector<1x1024xi32>
    %71 = arith.cmpi slt, %2, %70 : vector<1x1024xi32>
    %72 = arith.andi %69, %71 : vector<1x1024xi1>
    %73 = arith.extui %72 : vector<1x1024xi1> to vector<1x1024xi32>
    %74 = arith.sitofp %73 : vector<1x1024xi32> to vector<1x1024xf32>
    %75 = vector.broadcast %74 : vector<1x1024xf32> to vector<8x1024xf32>
    %76 = arith.mulf %67, %75 : vector<8x1024xf32>
    %77 = tpu.concatenate %18, %25, %35, %42, %7, %49, %59, %66, %76 in 0 : vector<8x1024xf32>, vector<8x1024xf32>, vector<8x1024xf32>, vector<8x1024xf32>, vector<8x1024xf32>, vector<8x1024xf32>, vector<8x1024xf32>, vector<8x1024xf32>, vector<8x1024xf32> -> vector<72x1024xf32>
    %cst = arith.constant dense<0.000000e+00> : vector<8x1024xf32>
    %78 = tpu.matmul %8, %77, %cst {dimension_numbers = #tpu.dot_dimension_numbers<[1], [0], [0], [1], [0, 0, 1, 1], [], []>} : vector<8x72xf32>, vector<72x1024xf32>, vector<8x1024xf32> -> vector<8x1024xf32>
    %c0_20 = arith.constant 0 : index
    %c0_21 = arith.constant 0 : index
    %79 = vector.load %arg4[%c0_20, %c0_21] : memref<8x1xf32, #tpu.memory_space<vmem>>, vector<8x1xf32>
    %80 = vector.broadcast %79 : vector<8x1xf32> to vector<8x1024xf32>
    %81 = arith.addf %78, %80 : vector<8x1024xf32>
    %cst_22 = arith.constant 0.000000e+00 : f32
    %82 = vector.broadcast %cst_22 : f32 to vector<8x1024xf32>
    %83 = arith.maximumf %81, %82 : vector<8x1024xf32>
    %c0_23 = arith.constant 0 : index
    %c0_24 = arith.constant 0 : index
    %84 = vector.load %arg5[%c0_23, %c0_24] : memref<8x72xf32, #tpu.memory_space<vmem>>, vector<8x72xf32>
    %c33_i32_25 = arith.constant 33 : i32
    %85 = tpu.dynamic_rotate %83 by %c33_i32_25 dim 1 : vector<8x1024xf32>, i32 -> vector<8x1024xf32>
    %c32_i32_26 = arith.constant 32 : i32
    %86 = vector.broadcast %c32_i32_26 : i32 to vector<1x1024xi32>
    %87 = arith.cmpi sge, %0, %86 : vector<1x1024xi32>
    %c1_i32_27 = arith.constant 1 : i32
    %88 = vector.broadcast %c1_i32_27 : i32 to vector<1x1024xi32>
    %89 = arith.cmpi sge, %2, %88 : vector<1x1024xi32>
    %90 = arith.andi %87, %89 : vector<1x1024xi1>
    %91 = arith.extui %90 : vector<1x1024xi1> to vector<1x1024xi32>
    %92 = arith.sitofp %91 : vector<1x1024xi32> to vector<1x1024xf32>
    %93 = vector.broadcast %92 : vector<1x1024xf32> to vector<8x1024xf32>
    %94 = arith.mulf %85, %93 : vector<8x1024xf32>
    %c32_i32_28 = arith.constant 32 : i32
    %95 = tpu.dynamic_rotate %83 by %c32_i32_28 dim 1 : vector<8x1024xf32>, i32 -> vector<8x1024xf32>
    %c32_i32_29 = arith.constant 32 : i32
    %96 = vector.broadcast %c32_i32_29 : i32 to vector<1x1024xi32>
    %97 = arith.cmpi sge, %0, %96 : vector<1x1024xi32>
    %98 = arith.extui %97 : vector<1x1024xi1> to vector<1x1024xi32>
    %99 = arith.sitofp %98 : vector<1x1024xi32> to vector<1x1024xf32>
    %100 = vector.broadcast %99 : vector<1x1024xf32> to vector<8x1024xf32>
    %101 = arith.mulf %95, %100 : vector<8x1024xf32>
    %c31_i32_30 = arith.constant 31 : i32
    %102 = tpu.dynamic_rotate %83 by %c31_i32_30 dim 1 : vector<8x1024xf32>, i32 -> vector<8x1024xf32>
    %c32_i32_31 = arith.constant 32 : i32
    %103 = vector.broadcast %c32_i32_31 : i32 to vector<1x1024xi32>
    %104 = arith.cmpi sge, %0, %103 : vector<1x1024xi32>
    %c31_i32_32 = arith.constant 31 : i32
    %105 = vector.broadcast %c31_i32_32 : i32 to vector<1x1024xi32>
    %106 = arith.cmpi slt, %2, %105 : vector<1x1024xi32>
    %107 = arith.andi %104, %106 : vector<1x1024xi1>
    %108 = arith.extui %107 : vector<1x1024xi1> to vector<1x1024xi32>
    %109 = arith.sitofp %108 : vector<1x1024xi32> to vector<1x1024xf32>
    %110 = vector.broadcast %109 : vector<1x1024xf32> to vector<8x1024xf32>
    %111 = arith.mulf %102, %110 : vector<8x1024xf32>
    %c1_i32_33 = arith.constant 1 : i32
    %112 = tpu.dynamic_rotate %83 by %c1_i32_33 dim 1 : vector<8x1024xf32>, i32 -> vector<8x1024xf32>
    %c1_i32_34 = arith.constant 1 : i32
    %113 = vector.broadcast %c1_i32_34 : i32 to vector<1x1024xi32>
    %114 = arith.cmpi sge, %2, %113 : vector<1x1024xi32>
    %115 = arith.extui %114 : vector<1x1024xi1> to vector<1x1024xi32>
    %116 = arith.sitofp %115 : vector<1x1024xi32> to vector<1x1024xf32>
    %117 = vector.broadcast %116 : vector<1x1024xf32> to vector<8x1024xf32>
    %118 = arith.mulf %112, %117 : vector<8x1024xf32>
    %c1023_i32_35 = arith.constant 1023 : i32
    %119 = tpu.dynamic_rotate %83 by %c1023_i32_35 dim 1 : vector<8x1024xf32>, i32 -> vector<8x1024xf32>
    %c31_i32_36 = arith.constant 31 : i32
    %120 = vector.broadcast %c31_i32_36 : i32 to vector<1x1024xi32>
    %121 = arith.cmpi slt, %2, %120 : vector<1x1024xi32>
    %122 = arith.extui %121 : vector<1x1024xi1> to vector<1x1024xi32>
    %123 = arith.sitofp %122 : vector<1x1024xi32> to vector<1x1024xf32>
    %124 = vector.broadcast %123 : vector<1x1024xf32> to vector<8x1024xf32>
    %125 = arith.mulf %119, %124 : vector<8x1024xf32>
    %c993_i32_37 = arith.constant 993 : i32
    %126 = tpu.dynamic_rotate %83 by %c993_i32_37 dim 1 : vector<8x1024xf32>, i32 -> vector<8x1024xf32>
    %c992_i32_38 = arith.constant 992 : i32
    %127 = vector.broadcast %c992_i32_38 : i32 to vector<1x1024xi32>
    %128 = arith.cmpi slt, %0, %127 : vector<1x1024xi32>
    %c1_i32_39 = arith.constant 1 : i32
    %129 = vector.broadcast %c1_i32_39 : i32 to vector<1x1024xi32>
    %130 = arith.cmpi sge, %2, %129 : vector<1x1024xi32>
    %131 = arith.andi %128, %130 : vector<1x1024xi1>
    %132 = arith.extui %131 : vector<1x1024xi1> to vector<1x1024xi32>
    %133 = arith.sitofp %132 : vector<1x1024xi32> to vector<1x1024xf32>
    %134 = vector.broadcast %133 : vector<1x1024xf32> to vector<8x1024xf32>
    %135 = arith.mulf %126, %134 : vector<8x1024xf32>
    %c992_i32_40 = arith.constant 992 : i32
    %136 = tpu.dynamic_rotate %83 by %c992_i32_40 dim 1 : vector<8x1024xf32>, i32 -> vector<8x1024xf32>
    %c992_i32_41 = arith.constant 992 : i32
    %137 = vector.broadcast %c992_i32_41 : i32 to vector<1x1024xi32>
    %138 = arith.cmpi slt, %0, %137 : vector<1x1024xi32>
    %139 = arith.extui %138 : vector<1x1024xi1> to vector<1x1024xi32>
    %140 = arith.sitofp %139 : vector<1x1024xi32> to vector<1x1024xf32>
    %141 = vector.broadcast %140 : vector<1x1024xf32> to vector<8x1024xf32>
    %142 = arith.mulf %136, %141 : vector<8x1024xf32>
    %c991_i32_42 = arith.constant 991 : i32
    %143 = tpu.dynamic_rotate %83 by %c991_i32_42 dim 1 : vector<8x1024xf32>, i32 -> vector<8x1024xf32>
    %c992_i32_43 = arith.constant 992 : i32
    %144 = vector.broadcast %c992_i32_43 : i32 to vector<1x1024xi32>
    %145 = arith.cmpi slt, %0, %144 : vector<1x1024xi32>
    %c31_i32_44 = arith.constant 31 : i32
    %146 = vector.broadcast %c31_i32_44 : i32 to vector<1x1024xi32>
    %147 = arith.cmpi slt, %2, %146 : vector<1x1024xi32>
    %148 = arith.andi %145, %147 : vector<1x1024xi1>
    %149 = arith.extui %148 : vector<1x1024xi1> to vector<1x1024xi32>
    %150 = arith.sitofp %149 : vector<1x1024xi32> to vector<1x1024xf32>
    %151 = vector.broadcast %150 : vector<1x1024xf32> to vector<8x1024xf32>
    %152 = arith.mulf %143, %151 : vector<8x1024xf32>
    %153 = tpu.concatenate %94, %101, %111, %118, %83, %125, %135, %142, %152 in 0 : vector<8x1024xf32>, vector<8x1024xf32>, vector<8x1024xf32>, vector<8x1024xf32>, vector<8x1024xf32>, vector<8x1024xf32>, vector<8x1024xf32>, vector<8x1024xf32>, vector<8x1024xf32> -> vector<72x1024xf32>
    %cst_45 = arith.constant dense<0.000000e+00> : vector<8x1024xf32>
    %154 = tpu.matmul %84, %153, %cst_45 {dimension_numbers = #tpu.dot_dimension_numbers<[1], [0], [0], [1], [0, 0, 1, 1], [], []>} : vector<8x72xf32>, vector<72x1024xf32>, vector<8x1024xf32> -> vector<8x1024xf32>
    %c0_46 = arith.constant 0 : index
    %c0_47 = arith.constant 0 : index
    %155 = vector.load %arg6[%c0_46, %c0_47] : memref<8x1xf32, #tpu.memory_space<vmem>>, vector<8x1xf32>
    %156 = vector.broadcast %155 : vector<8x1xf32> to vector<8x1024xf32>
    %157 = arith.addf %154, %156 : vector<8x1024xf32>
    %cst_48 = arith.constant 0.000000e+00 : f32
    %158 = vector.broadcast %cst_48 : f32 to vector<8x1024xf32>
    %159 = arith.maximumf %157, %158 : vector<8x1024xf32>
    %c0_49 = arith.constant 0 : index
    %c0_50 = arith.constant 0 : index
    %c0_51 = arith.constant 0 : index
    %160 = vector.load %arg7[%c0_49, %c0_50, %c0_51] : memref<1x8x1024xf32, #tpu.memory_space<vmem>>, vector<1x8x1024xf32>
    %161 = vector.shape_cast %160 : vector<1x8x1024xf32> to vector<8x1024xf32>
    %162 = vector.shape_cast %159 : vector<8x1024xf32> to vector<1x8x1024xf32>
    tpu.vector_store %arg7[%c0_49, %c0_50, %c0_51], %162 {strides = array<i32>} : memref<1x8x1024xf32, #tpu.memory_space<vmem>>, vector<1x8x1024xf32>,
    return
  }
  func.func @transform_0(%arg0: i32) -> (i32, i32, i32) {
    %c0_i32 = arith.constant 0 : i32
    %c0_i32_0 = arith.constant 0 : i32
    %c0_i32_1 = arith.constant 0 : i32
    return %arg0, %c0_i32, %c0_i32_0 : i32, i32, i32
  }
  func.func @transform_1(%arg0: i32) -> (i32, i32, i32) {
    %c0_i32 = arith.constant 0 : i32
    %c0_i32_0 = arith.constant 0 : i32
    %c0_i32_1 = arith.constant 0 : i32
    return %arg0, %c0_i32, %c0_i32_0 : i32, i32, i32
  }
  func.func @transform_2(%arg0: i32) -> (i32, i32) {
    %c0_i32 = arith.constant 0 : i32
    %c0_i32_0 = arith.constant 0 : i32
    %c0_i32_1 = arith.constant 0 : i32
    return %c0_i32, %c0_i32_0 : i32, i32
  }
  func.func @transform_3(%arg0: i32) -> (i32, i32) {
    %c0_i32 = arith.constant 0 : i32
    %c0_i32_0 = arith.constant 0 : i32
    %c0_i32_1 = arith.constant 0 : i32
    return %c0_i32, %c0_i32_0 : i32, i32
  }
  func.func @transform_4(%arg0: i32) -> (i32, i32) {
    %c0_i32 = arith.constant 0 : i32
    %c0_i32_0 = arith.constant 0 : i32
    %c0_i32_1 = arith.constant 0 : i32
    return %c0_i32, %c0_i32_0 : i32, i32
  }
  func.func @transform_5(%arg0: i32) -> (i32, i32) {
    %c0_i32 = arith.constant 0 : i32
    %c0_i32_0 = arith.constant 0 : i32
    %c0_i32_1 = arith.constant 0 : i32
    return %c0_i32, %c0_i32_0 : i32, i32
  }
  func.func @transform_6(%arg0: i32) -> (i32, i32, i32) {
    %c0_i32 = arith.constant 0 : i32
    %c0_i32_0 = arith.constant 0 : i32
    %c0_i32_1 = arith.constant 0 : i32
    return %arg0, %c0_i32, %c0_i32_0 : i32, i32, i32
  }
}

</mosaic_0001>

<llo_original>
// kernel: tpu_custom_call.1
$region0: #{tpu_custom_call.1}
  #allocation0 [shape = 'u32[]', space=smem, size = 0x4, offset = 0x4, fixed_abs, tag = 'smem constant byte address 0x4 - core index']
  #allocation1 [shape = 'u32[144,128]{1,0:T(1,128)}', space=vmem, size = 0x12000, scoped, tag = 'internal scratch']
  %s0 = inlined_call_operand.hbm [shape: s32[8,128], index: 0, kind: input, shape index: {}]
  %s1 = inlined_call_operand.hbm [shape: s32[8,128], index: 1, kind: output, shape index: {}]
  %s2 = sld [smem:[#allocation0]]
  $region18: #{tpu_custom_call.1} parent=0
    _
  %s4 = ssub.s32 1, %s2
  %s5 = scalar_select 0, %s4, %s2
  $region1: #{tpu_custom_call.1} parent=0
    #allocation2 [shape = 'u8[4096]{0}', space=vmem, size = 0x1000, scoped, tag = 'input window, operand 0, single buffered']
    #allocation3 [shape = 's32[1]{0}', space=sflag, size = 0x4, scoped, tag = 'scoped memory for tpu_custom_call.1']
    #allocation4 [shape = 's32[1]{0}', space=sflag, size = 0x4, scoped, tag = 'scoped memory for tpu_custom_call.1']
    #allocation5 [shape = 'u8[4096]{0}', space=vmem, size = 0x1000, scoped, tag = 'output window, operand 0, single buffered']
    %6 = vsyncpa [#allocation3], 0
    %7 = vsyncpa [#allocation4], 0
    // Predicated region
    $region2: #{tpu_custom_call.1} parent=1 // pred_check
      _
    $region3: #{tpu_custom_call.1} parent=1 // pred_check_branch
      %9 = sbr.rel (0) target = $region5
    $region4: #{tpu_custom_call.1} parent=1 // pred_region
      %s11 = ssub.s32 128, 128
      %12 = vsyncadd [#allocation3], %s11
      %s14 = sshll.u32 [#allocation2], 4
      %s15 = int_to_ptr.vmem [resolvable:$true] %s14
      %17 = dma.hbm_to_vmem [thread:$0]  %s0, 128, %s15, [#allocation3]
    $region5: #{tpu_custom_call.1} parent=1 // pred_fallthru
      _
    // Predicated region
    $region6: #{tpu_custom_call.1} parent=1 // pred_check
      _
    $region7: #{tpu_custom_call.1} parent=1 // pred_check_branch
      %19 = sbr.rel (0) target = $region9
    $region8: #{tpu_custom_call.1} parent=1 // pred_region
      %20 = dma.done [#allocation3], 128
    $region9: #{tpu_custom_call.1} parent=1 // pred_fallthru
      _
    %v21 = vld [vmem:[#allocation2] sm:$0xff]
    %22 = vrot.lane.b32.xlu0 %v21, 1
    %v23 = vpop.permute.xlu0 %22
    %24 = vst [vmem:[#allocation5] sm:$0xff] %v23
    // Predicated region
    $region10: #{tpu_custom_call.1} parent=1 // pred_check
      _
    $region11: #{tpu_custom_call.1} parent=1 // pred_check_branch
      %26 = sbr.rel (0) target = $region13
    $region12: #{tpu_custom_call.1} parent=1 // pred_region
      %s28 = ssub.s32 128, 128
      %29 = vsyncadd [#allocation4], %s28
      %s31 = sshll.u32 [#allocation5], 4
      %s32 = int_to_ptr.vmem [resolvable:$true] %s31
      %34 = dma.vmem_to_hbm [thread:$0]  %s32, 128, %s1, [#allocation4]
    $region13: #{tpu_custom_call.1} parent=1 // pred_fallthru
      _
    // Predicated region
    $region14: #{tpu_custom_call.1} parent=1 // pred_check
      _
    $region15: #{tpu_custom_call.1} parent=1 // pred_check_branch
      %36 = sbr.rel (0) target = $region17
    $region16: #{tpu_custom_call.1} parent=1 // pred_region
      %37 = dma.done [#allocation4], 128
    $region17: #{tpu_custom_call.1} parent=1 // pred_fallthru
      _
    %38 = vsyncpa [#allocation3], 1
    %39 = vsyncpa [#allocation4], 1

// kernel: conv_block_up.2
$region0: #{conv_block_up.2}
  #allocation0 [shape = 'u32[]', space=smem, size = 0x4, offset = 0x4, fixed_abs, tag = 'smem constant byte address 0x4 - core index']
  #allocation1 [shape = 'u32[144,128]{1,0:T(1,128)}', space=vmem, size = 0x12000, scoped, tag = 'internal scratch']
  %s0 = inlined_call_operand.vmem [shape: f32[2,4,256], index: 0, kind: input, shape index: {}]
  %s1 = inlined_call_operand.vmem [shape: f32[16,4], index: 1, kind: input, shape index: {}]
  %s2 = inlined_call_operand.vmem [shape: f32[16,1], index: 2, kind: input, shape index: {}]
  %s3 = inlined_call_operand.vmem [shape: f32[2,16,256], index: 3, kind: output, shape index: {}]
  %s4 = sld [smem:[#allocation0]]
  $region45: #{conv_block_up.2} parent=0
    _
  %s6 = ssub.s32 1, %s4
  %s7 = scalar_select 0, %s6, %s4
  loop: start=0, step=1, limit=4
  $region2: #{conv_block_up.2} parent=0 // loop_pre_header
    _
  $region3: #{conv_block_up.2} parent=0 // loop_header
    %s9 = sphi 0, %s13
    %p10 = scmp.ge.s32.totalorder %s9, 4
    %s16 = sphi 0, %s28
    %s17 = sphi 0, %s24
    %s18 = sphi 0, %s16
    %s19 = sphi 0, %s17
    %s20 = sphi 0, %s18
    %s21 = sphi 0, %s19
    %s33 = sphi 0, %s35
    %s36 = sphi 0, %s33
    %s37 = sphi 0, %s36
    %s53 = sphi 0, %s37
    %s57 = sphi 0, %s57
    %s59 = sphi 0, %s57
    %s60 = sphi 0, %s59
    %s74 = sphi 0, %s60
    %s78 = sphi 0, %s78
    %s80 = sphi 0, %s78
    %s81 = sphi 0, %s80
    %s95 = sphi 0, %s81
    %s103 = sphi 0, %s105
    %s106 = sphi 0, %s103
    %s107 = sphi 0, %s106
    %s123 = sphi 0, %s107
  $region4: #{conv_block_up.2} parent=0 // loop_header_branch
    %12 = sbr.rel (%p10) target = $region8
  $region5: #{conv_block_up.2} parent=0 // loop_body
    %s14 = ssub.s32 %s9, 1
    %s15 = ssub.s32 %s9, 2
    %s22 = sadd.s32 1, %s17
    %p23 = scmp.ge.s32.totalorder %s22, 1
    %s24 = scalar_select %p23, 0, %s22
    %s25 = sadd.s32 1, %s16
    %s26 = scalar_select %p23, %s25, %s16
    %p27 = scmp.ge.s32.totalorder %s26, 2
    %s28 = scalar_select %p27, 0, %s26
    %s29 = ssub.s32 %s16, %s28
    %s30 = ssub.s32 %s17, %s24
    %s31 = sor.u32 %s29, %s30
    %p32 = scmp.eq.s32.totalorder %s31, 0
    %s34 = sadd.s32 %s33, 1
    %s35 = scalar_select %p32, %s33, %s34
    %p38 = pneg %p32
    %p39 = scmp.eq.s32.totalorder %s9, 1
    %p40 = por %p38, %p39
    %p41 = scmp.ne.s32.totalorder %s33, %s36
    %p42 = scmp.eq.s32.totalorder %s9, 0
    %p43 = por %p41, %p42
    %p44 = scmp.ne.s32.totalorder %s33, %s36
    %p45 = scmp.eq.s32.totalorder %s14, 1
    %p46 = por %p44, %p45
    %p47 = scmp.ne.s32.totalorder %s36, %s37
    %p48 = scmp.eq.s32.totalorder %s14, 0
    %p49 = por %p47, %p48
    %p50 = scmp.ne.s32.totalorder %s36, %s37
    %p51 = scmp.eq.s32.totalorder %s15, 1
    %p52 = por %p50, %p51
    %p54 = scmp.ne.s32.totalorder %s37, %s53
    %p55 = scmp.eq.s32.totalorder %s15, 0
    %p56 = por %p54, %p55
    %s58 = sadd.s32 %s57, 1
    %p61 = scmp.eq.s32.totalorder %s9, 1
    %p62 = scmp.ne.s32.totalorder %s57, %s59
    %p63 = scmp.eq.s32.totalorder %s9, 0
    %p64 = por %p62, %p63
    %p65 = scmp.ne.s32.totalorder %s57, %s59
    %p66 = scmp.eq.s32.totalorder %s14, 1
    %p67 = por %p65, %p66
    %p68 = scmp.ne.s32.totalorder %s59, %s60
    %p69 = scmp.eq.s32.totalorder %s14, 0
    %p70 = por %p68, %p69
    %p71 = scmp.ne.s32.totalorder %s59, %s60
    %p72 = scmp.eq.s32.totalorder %s15, 1
    %p73 = por %p71, %p72
    %p75 = scmp.ne.s32.totalorder %s60, %s74
    %p76 = scmp.eq.s32.totalorder %s15, 0
    %p77 = por %p75, %p76
    %s79 = sadd.s32 %s78, 1
    %p82 = scmp.eq.s32.totalorder %s9, 1
    %p83 = scmp.ne.s32.totalorder %s78, %s80
    %p84 = scmp.eq.s32.totalorder %s9, 0
    %p85 = por %p83, %p84
    %p86 = scmp.ne.s32.totalorder %s78, %s80
    %p87 = scmp.eq.s32.totalorder %s14, 1
    %p88 = por %p86, %p87
    %p89 = scmp.ne.s32.totalorder %s80, %s81
    %p90 = scmp.eq.s32.totalorder %s14, 0
    %p91 = por %p89, %p90
    %p92 = scmp.ne.s32.totalorder %s80, %s81
    %p93 = scmp.eq.s32.totalorder %s15, 1
    %p94 = por %p92, %p93
    %p96 = scmp.ne.s32.totalorder %s81, %s95
    %p97 = scmp.eq.s32.totalorder %s15, 0
    %p98 = por %p96, %p97
    %s99 = ssub.s32 %s16, %s28
    %s100 = ssub.s32 %s17, %s24
    %s101 = sor.u32 %s99, %s100
    %p102 = scmp.eq.s32.totalorder %s101, 0
    %s104 = sadd.s32 %s103, 1
    %s105 = scalar_select %p102, %s103, %s104
    %p108 = pneg %p102
    %p109 = scmp.eq.s32.totalorder %s9, 1
    %p110 = por %p108, %p109
    %p111 = scmp.ne.s32.totalorder %s103, %s106
    %p112 = scmp.eq.s32.totalorder %s9, 0
    %p113 = por %p111, %p112
    %p114 = scmp.ne.s32.totalorder %s103, %s106
    %p115 = scmp.eq.s32.totalorder %s14, 1
    %p116 = por %p114, %p115
    %p117 = scmp.ne.s32.totalorder %s106, %s107
    %p118 = scmp.eq.s32.totalorder %s14, 0
    %p119 = por %p117, %p118
    %p120 = scmp.ne.s32.totalorder %s106, %s107
    %p121 = scmp.eq.s32.totalorder %s15, 1
    %p122 = por %p120, %p121
    %p124 = scmp.ne.s32.totalorder %s107, %s123
    %p125 = scmp.eq.s32.totalorder %s15, 0
    %p126 = por %p124, %p125
    %p127 = scmp.le.s32.totalorder 1, %s9
    %p128 = scmp.lt.s32.totalorder %s9, 3
    %p129 = pnand %p127, %p128
    %p130 = pneg %p129
    // Predicated region
    $region9: #{conv_block_up.2} parent=5 // pred_check
      _
    $region10: #{conv_block_up.2} parent=5 // pred_check_branch
      %132 = sbr.rel (%p129) target = $region12
    $region11: #{conv_block_up.2} parent=5 // pred_region
      %s133 = ssub.s32 %s9, 1
      // Predicated region
      $region13: #{conv_block_up.2} parent=11 // pred_check
        %p134 = pneg %p70
      $region14: #{conv_block_up.2} parent=11 // pred_check_branch
        %136 = sbr.rel (%p134) target = $region16
      $region15: #{conv_block_up.2} parent=11 // pred_region
        _
      $region16: #{conv_block_up.2} parent=11 // pred_fallthru
        _
      // Predicated region
      $region17: #{conv_block_up.2} parent=11 // pred_check
        %p137 = pneg %p91
      $region18: #{conv_block_up.2} parent=11 // pred_check_branch
        %139 = sbr.rel (%p137) target = $region20
      $region19: #{conv_block_up.2} parent=11 // pred_region
        _
      $region20: #{conv_block_up.2} parent=11 // pred_fallthru
        _
    $region12: #{conv_block_up.2} parent=5 // pred_fallthru
      _
    %p140 = scmp.lt.s32.totalorder %s9, 2
    // Predicated region
    $region21: #{conv_block_up.2} parent=5 // pred_check
      %p141 = pneg %p140
    $region22: #{conv_block_up.2} parent=5 // pred_check_branch
      %143 = sbr.rel (%p141) target = $region24
    $region23: #{conv_block_up.2} parent=5 // pred_region
      // Predicated region
      $region25: #{conv_block_up.2} parent=23 // pred_check
        %p144 = pneg %p43
      $region26: #{conv_block_up.2} parent=23 // pred_check_branch
        %146 = sbr.rel (%p144) target = $region28
      $region27: #{conv_block_up.2} parent=23 // pred_region
        %s147 = smul.u32 2, %s17
        %p148 = scmp.lt.s32.totalorder %s16, 1
        %s149 = scalar_select %p148, %s16, 1
        %p150 = scmp.lt.s32.totalorder %s147, 1
        %s151 = scalar_select %p150, %s147, 1
        %s152 = smul.addr %s149, 2
        %s153 = sadd.s32 %s151, %s152
        %s154 = smul.addr %s153, 4
        %s155 = scalar_lea.vmem %s0, %s154
        %s156 = smul.u32 2, %s17
      $region28: #{conv_block_up.2} parent=23 // pred_fallthru
        _
    $region24: #{conv_block_up.2} parent=5 // pred_fallthru
      _
    %p157 = scmp.le.s32.totalorder 1, %s9
    %p158 = scmp.lt.s32.totalorder %s9, 3
    %p159 = pnand %p157, %p158
    %p160 = pneg %p159
    // Predicated region
    $region29: #{conv_block_up.2} parent=5 // pred_check
      _
    $region30: #{conv_block_up.2} parent=5 // pred_check_branch
      %162 = sbr.rel (%p159) target = $region32
    $region31: #{conv_block_up.2} parent=5 // pred_region
      %s163 = ssub.s32 %s9, 1
      %s164 = smul.u32 2, %s19
      %p165 = scmp.lt.s32.totalorder %s18, 1
      %s166 = scalar_select %p165, %s18, 1
      %p167 = scmp.lt.s32.totalorder %s164, 1
      %s168 = scalar_select %p167, %s164, 1
      %s169 = smul.addr %s166, 2
      %s170 = sadd.s32 %s168, %s169
      %s171 = smul.addr %s170, 4
      %s172 = scalar_lea.vmem %s0, %s171
      %p173 = pneg %p49
      %p174 = pneg %p46
      %p175 = pneg %p70
      %p176 = pneg %p67
      %p177 = pneg %p91
      %p178 = pneg %p88
      %p179 = pneg %p119
      %p180 = pneg %p116
      %s181 = smul.u32 2, %s19
      %p182 = scmp.lt.s32.totalorder %s18, 1
      %s183 = scalar_select %p182, %s18, 1
      %p184 = scmp.lt.s32.totalorder %s181, 1
      %s185 = scalar_select %p184, %s181, 1
      %s186 = smul.addr %s183, 4
      %s187 = sadd.s32 %s185, %s186
      %s188 = smul.addr %s187, 8
      %s189 = scalar_lea.vmem %s3, %s188
      %s190 = smul.u32 2, %s19
      %p191 = scmp.lt.s32.totalorder %s18, 1
      %s192 = scalar_select %p191, %s18, 1
      %p193 = scmp.lt.s32.totalorder %s190, 1
      %s194 = scalar_select %p193, %s190, 1
      %s195 = smul.addr %s192, 2
      %s196 = sadd.s32 %s194, %s195
      %s197 = smul.addr %s196, 4
      %s198 = scalar_lea.vmem %s0, %s197
      %s199 = smul.u32 2, %s19
      %s200 = smul.u32 2, %s19
      %p201 = scmp.lt.s32.totalorder %s18, 1
      %s202 = scalar_select %p201, %s18, 1
      %p203 = scmp.lt.s32.totalorder %s200, 1
      %s204 = scalar_select %p203, %s200, 1
      %s205 = smul.addr %s202, 4
      %s206 = sadd.s32 %s204, %s205
      %s207 = smul.addr %s206, 8
      %s208 = scalar_lea.vmem %s3, %s207
      %s209 = smul.u32 2, %s19
      %v210 = vld [vmem:[%s1] sm:$0xff]
      %v211 = vld [vmem:[%s1 + $0x8] sm:$0xff]
      %v212 = vld [vmem:[%s198] sm:$0xff]
      %v213 = vld [vmem:[%s2] sm:$0xff]
      %v214 = vld [vmem:[%s2 + $0x8] sm:$0xff]
      %216 = vset.pattern.permute.xlu0 0
      %217 = vperm.xlu0 %216, %v213
      %v218 = vpop.permute.xlu0 %217
      %221 = vset.pattern.permute.xlu0 0
      %222 = vperm.xlu0 %221, %v214
      %v223 = vpop.permute.xlu0 %222
      %v226 = vcombine.high %v212, %v212
      %vm227 = vcmask 31744
      %v229 = vsel %vm227, %v210, 0
      %v232 = vsel %vm227, %v211, 0
      %vm234 = vcmask 1043456
      %v235 = vsel %vm234, %v212, 0
      %v237 = vsel %vm234, %v226, 0
      %239 = vmatprep.subr.mxu0 %v237
      %240 = vmatpush1.msra.mxu0 %v235
      %241 = vmatprep.subr.mxu0 0.0
      %242 = vmatpush1.msra.mxu0 0.0
      %243 = vmatprep.subr.mxu0 0.0
      %244 = vmatpush1.msra.mxu0 0.0
      %245 = vmatprep.subr.mxu0 0.0
      %246 = vmatpush1.msra.mxu0 0.0
      %247 = vmatprep.subr.mxu0 0.0
      %248 = vmatpush1.msra.mxu0 0.0
      %249 = vmatprep.subr.mxu0 0.0
      %250 = vmatpush1.msra.mxu0 0.0
      %251 = vmatprep.subr.mxu0 0.0
      %252 = vmatpush1.msra.mxu0 0.0
      %253 = vmatprep.subr.mxu0 0.0
      %254 = vmatpush1.msra.mxu0 0.0
      %255 = vmatprep.subr.mxu0 0.0
      %256 = vmatpush1.msra.mxu0 0.0
      %257 = vmatprep.subr.mxu0 0.0
      %258 = vmatpush1.msra.mxu0 0.0
      %259 = vmatprep.subr.mxu0 0.0
      %260 = vmatpush1.msra.mxu0 0.0
      %261 = vmatprep.subr.mxu0 0.0
      %262 = vmatpush1.msra.mxu0 0.0
      %263 = vmatprep.subr.mxu0 0.0
      %264 = vmatpush1.msra.mxu0 0.0
      %265 = vmatprep.subr.mxu0 0.0
      %266 = vmatpush1.msra.mxu0 0.0
      %267 = vmatprep.subr.mxu0 0.0
      %268 = vmatpush1.msra.mxu0 0.0
      %269 = vmatprep.subr.mxu0 0.0
      %270 = vmatpush1.msra.mxu0 0.0
      %271 = vmatprep.subr.mxu0 0.0
      %272 = vmatpush1.msra.mxu0 0.0
      %273 = vmatprep.subr.mxu0 0.0
      %274 = vmatpush1.msra.mxu0 0.0
      %275 = vmatprep.subr.mxu0 0.0
      %276 = vmatpush1.msra.mxu0 0.0
      %277 = vmatprep.subr.mxu0 0.0
      %278 = vmatpush1.msra.mxu0 0.0
      %279 = vmatprep.subr.mxu0 0.0
      %280 = vmatpush1.msra.mxu0 0.0
      %281 = vmatprep.subr.mxu0 0.0
      %282 = vmatpush1.msra.mxu0 0.0
      %283 = vmatprep.subr.mxu0 0.0
      %284 = vmatpush1.msra.mxu0 0.0
      %285 = vmatprep.subr.mxu0 0.0
      %286 = vmatpush1.msra.mxu0 0.0
      %287 = vmatprep.subr.mxu0 0.0
      %288 = vmatpush1.msra.mxu0 0.0
      %289 = vmatprep.subr.mxu0 0.0
      %290 = vmatpush1.msra.mxu0 0.0
      %291 = vmatprep.subr.mxu0 0.0
      %292 = vmatpush1.msra.mxu0 0.0
      %293 = vmatprep.subr.mxu0 0.0
      %294 = vmatpush1.msra.mxu0 0.0
      %295 = vmatprep.subr.mxu0 0.0
      %296 = vmatpush1.msra.mxu0 0.0
      %297 = vmatprep.subr.mxu0 0.0
      %298 = vmatpush1.msra.mxu0 0.0
      %299 = vmatprep.subr.mxu0 0.0
      %300 = vmatpush1.msra.mxu0 0.0
      %301 = vmatprep.subr.mxu0 0.0
      %302 = vmatpush1.msra.mxu0 0.0
      %303 = vmatprep.mubr.f32.mxu0 0.0
      %304 = vmatmul.mubr.f32.gmra.mrb[0].mxu0 %v229
      %v305 = vpop.f32.mrb[0].mxu0
      %v306 = vadd.f32 %v218, %v305
      %v307 = vpop.f32.mrb[0].mxu0
      %v308 = vadd.f32 %v218, %v307
      %309 = vmatprep.mubr.f32.mxu0 0.0
      %310 = vmatmul.mubr.f32.gmra.mrb[0].mxu0 %v232
      %v311 = vpop.f32.mrb[0].mxu0
      %v312 = vadd.f32 %v223, %v311
      %v313 = vpop.f32.mrb[0].mxu0
      %v314 = vadd.f32 %v223, %v313
      %315 = vdwg.mxu0
      %316 = vst [vmem:[%s208] sm:$0xff] %v306
      %317 = vst [vmem:[%s208 + $0x8] sm:$0xff] %v308
      %318 = vst [vmem:[%s208 + $0x10] sm:$0xff] %v312
      %319 = vst [vmem:[%s208 + $0x18] sm:$0xff] %v314
      %s320 = smul.u32 2, %s19
      %p321 = scmp.lt.s32.totalorder %s18, 1
      %s322 = scalar_select %p321, %s18, 1
      %p323 = scmp.lt.s32.totalorder %s320, 1
      %s324 = scalar_select %p323, %s320, 1
      %s325 = smul.addr %s322, 4
      %s326 = sadd.s32 %s324, %s325
      %s327 = smul.addr %s326, 8
      %s328 = scalar_lea.vmem %s3, %s327
      // Predicated region
      $region33: #{conv_block_up.2} parent=31 // pred_check
        %p329 = pneg %p116
      $region34: #{conv_block_up.2} parent=31 // pred_check_branch
        %331 = sbr.rel (%p329) target = $region36
      $region35: #{conv_block_up.2} parent=31 // pred_region
        %s332 = smul.u32 2, %s19
      $region36: #{conv_block_up.2} parent=31 // pred_fallthru
        _
    $region32: #{conv_block_up.2} parent=5 // pred_fallthru
      _
    %p333 = scmp.le.s32.totalorder 2, %s9
    // Predicated region
    $region37: #{conv_block_up.2} parent=5 // pred_check
      %p334 = pneg %p333
    $region38: #{conv_block_up.2} parent=5 // pred_check_branch
      %336 = sbr.rel (%p334) target = $region40
    $region39: #{conv_block_up.2} parent=5 // pred_region
      %s337 = ssub.s32 %s9, 2
      // Predicated region
      $region41: #{conv_block_up.2} parent=39 // pred_check
        %p338 = pneg %p122
      $region42: #{conv_block_up.2} parent=39 // pred_check_branch
        %340 = sbr.rel (%p338) target = $region44
      $region43: #{conv_block_up.2} parent=39 // pred_region
        %s341 = smul.u32 2, %s21
        %p342 = scmp.lt.s32.totalorder %s20, 1
        %s343 = scalar_select %p342, %s20, 1
        %p344 = scmp.lt.s32.totalorder %s341, 1
        %s345 = scalar_select %p344, %s341, 1
        %s346 = smul.addr %s343, 4
        %s347 = sadd.s32 %s345, %s346
        %s348 = smul.addr %s347, 8
        %s349 = scalar_lea.vmem %s3, %s348
      $region44: #{conv_block_up.2} parent=39 // pred_fallthru
        _
    $region40: #{conv_block_up.2} parent=5 // pred_fallthru
      _
  $region6: #{conv_block_up.2} parent=0 // loop_footer
    %s13 = sadd.s32 1, %s9
  $region7: #{conv_block_up.2} parent=0 // loop_footer_branch
    %8 = sbr.rel target = $region3
  $region8: #{conv_block_up.2} parent=0 // loop_exit
    _

// kernel: conv_block_up.3
$region0: #{conv_block_up.3}
  #allocation0 [shape = 'u32[]', space=smem, size = 0x4, offset = 0x4, fixed_abs, tag = 'smem constant byte address 0x4 - core index']
  #allocation1 [shape = 'u32[144,128]{1,0:T(1,128)}', space=vmem, size = 0x12000, scoped, tag = 'internal scratch']
  %s0 = inlined_call_operand.vmem [shape: f32[2,4,1024], index: 0, kind: input, shape index: {}]
  %s1 = inlined_call_operand.vmem [shape: f32[2,4,1024], index: 1, kind: input, shape index: {}]
  %s2 = inlined_call_operand.vmem [shape: f32[8,72], index: 2, kind: input, shape index: {}]
  %s3 = inlined_call_operand.vmem [shape: f32[8,1], index: 3, kind: input, shape index: {}]
  %s4 = inlined_call_operand.vmem [shape: f32[8,72], index: 4, kind: input, shape index: {}]
  %s5 = inlined_call_operand.vmem [shape: f32[8,1], index: 5, kind: input, shape index: {}]
  %s6 = inlined_call_operand.vmem [shape: f32[2,8,1024], index: 6, kind: output, shape index: {}]
  %s7 = sld [smem:[#allocation0]]
  $region57: #{conv_block_up.3} parent=0
    _
  %s9 = ssub.s32 1, %s7
  %s10 = scalar_select 0, %s9, %s7
  loop: start=0, step=1, limit=4
  $region2: #{conv_block_up.3} parent=0 // loop_pre_header
    _
  $region3: #{conv_block_up.3} parent=0 // loop_header
    %s12 = sphi 0, %s16
    %p13 = scmp.ge.s32.totalorder %s12, 4
    %s22 = sphi 0, %s24
    %s25 = sphi 0, %s22
    %s26 = sphi 0, %s25
    %s42 = sphi 0, %s26
    %s48 = sphi 0, %s50
    %s51 = sphi 0, %s48
    %s52 = sphi 0, %s51
    %s68 = sphi 0, %s52
    %s72 = sphi 0, %s72
    %s74 = sphi 0, %s72
    %s75 = sphi 0, %s74
    %s89 = sphi 0, %s75
    %s93 = sphi 0, %s93
    %s95 = sphi 0, %s93
    %s96 = sphi 0, %s95
    %s110 = sphi 0, %s96
    %s114 = sphi 0, %s114
    %s116 = sphi 0, %s114
    %s117 = sphi 0, %s116
    %s131 = sphi 0, %s117
    %s135 = sphi 0, %s135
    %s137 = sphi 0, %s135
    %s138 = sphi 0, %s137
    %s152 = sphi 0, %s138
    %s158 = sphi 0, %s160
    %s161 = sphi 0, %s158
    %s162 = sphi 0, %s161
    %s178 = sphi 0, %s162
  $region4: #{conv_block_up.3} parent=0 // loop_header_branch
    %15 = sbr.rel (%p13) target = $region8
  $region5: #{conv_block_up.3} parent=0 // loop_body
    %s17 = ssub.s32 %s12, 1
    %s18 = ssub.s32 %s12, 2
    %s19 = sadd.s32 %s12, 1
    %s20 = ssub.s32 %s12, %s19
    %p21 = scmp.eq.s32.totalorder %s20, 0
    %s23 = sadd.s32 %s22, 1
    %s24 = scalar_select %p21, %s22, %s23
    %p27 = pneg %p21
    %p28 = scmp.eq.s32.totalorder %s12, 1
    %p29 = por %p27, %p28
    %p30 = scmp.ne.s32.totalorder %s22, %s25
    %p31 = scmp.eq.s32.totalorder %s12, 0
    %p32 = por %p30, %p31
    %p33 = scmp.ne.s32.totalorder %s22, %s25
    %p34 = scmp.eq.s32.totalorder %s17, 1
    %p35 = por %p33, %p34
    %p36 = scmp.ne.s32.totalorder %s25, %s26
    %p37 = scmp.eq.s32.totalorder %s17, 0
    %p38 = por %p36, %p37
    %p39 = scmp.ne.s32.totalorder %s25, %s26
    %p40 = scmp.eq.s32.totalorder %s18, 1
    %p41 = por %p39, %p40
    %p43 = scmp.ne.s32.totalorder %s26, %s42
    %p44 = scmp.eq.s32.totalorder %s18, 0
    %p45 = por %p43, %p44
    %s46 = ssub.s32 %s12, %s19
    %p47 = scmp.eq.s32.totalorder %s46, 0
    %s49 = sadd.s32 %s48, 1
    %s50 = scalar_select %p47, %s48, %s49
    %p53 = pneg %p47
    %p54 = scmp.eq.s32.totalorder %s12, 1
    %p55 = por %p53, %p54
    %p56 = scmp.ne.s32.totalorder %s48, %s51
    %p57 = scmp.eq.s32.totalorder %s12, 0
    %p58 = por %p56, %p57
    %p59 = scmp.ne.s32.totalorder %s48, %s51
    %p60 = scmp.eq.s32.totalorder %s17, 1
    %p61 = por %p59, %p60
    %p62 = scmp.ne.s32.totalorder %s51, %s52
    %p63 = scmp.eq.s32.totalorder %s17, 0
    %p64 = por %p62, %p63
    %p65 = scmp.ne.s32.totalorder %s51, %s52
    %p66 = scmp.eq.s32.totalorder %s18, 1
    %p67 = por %p65, %p66
    %p69 = scmp.ne.s32.totalorder %s52, %s68
    %p70 = scmp.eq.s32.totalorder %s18, 0
    %p71 = por %p69, %p70
    %s73 = sadd.s32 %s72, 1
    %p76 = scmp.eq.s32.totalorder %s12, 1
    %p77 = scmp.ne.s32.totalorder %s72, %s74
    %p78 = scmp.eq.s32.totalorder %s12, 0
    %p79 = por %p77, %p78
    %p80 = scmp.ne.s32.totalorder %s72, %s74
    %p81 = scmp.eq.s32.totalorder %s17, 1
    %p82 = por %p80, %p81
    %p83 = scmp.ne.s32.totalorder %s74, %s75
    %p84 = scmp.eq.s32.totalorder %s17, 0
    %p85 = por %p83, %p84
    %p86 = scmp.ne.s32.totalorder %s74, %s75
    %p87 = scmp.eq.s32.totalorder %s18, 1
    %p88 = por %p86, %p87
    %p90 = scmp.ne.s32.totalorder %s75, %s89
    %p91 = scmp.eq.s32.totalorder %s18, 0
    %p92 = por %p90, %p91
    %s94 = sadd.s32 %s93, 1
    %p97 = scmp.eq.s32.totalorder %s12, 1
    %p98 = scmp.ne.s32.totalorder %s93, %s95
    %p99 = scmp.eq.s32.totalorder %s12, 0
    %p100 = por %p98, %p99
    %p101 = scmp.ne.s32.totalorder %s93, %s95
    %p102 = scmp.eq.s32.totalorder %s17, 1
    %p103 = por %p101, %p102
    %p104 = scmp.ne.s32.totalorder %s95, %s96
    %p105 = scmp.eq.s32.totalorder %s17, 0
    %p106 = por %p104, %p105
    %p107 = scmp.ne.s32.totalorder %s95, %s96
    %p108 = scmp.eq.s32.totalorder %s18, 1
    %p109 = por %p107, %p108
    %p111 = scmp.ne.s32.totalorder %s96, %s110
    %p112 = scmp.eq.s32.totalorder %s18, 0
    %p113 = por %p111, %p112
    %s115 = sadd.s32 %s114, 1
    %p118 = scmp.eq.s32.totalorder %s12, 1
    %p119 = scmp.ne.s32.totalorder %s114, %s116
    %p120 = scmp.eq.s32.totalorder %s12, 0
    %p121 = por %p119, %p120
    %p122 = scmp.ne.s32.totalorder %s114, %s116
    %p123 = scmp.eq.s32.totalorder %s17, 1
    %p124 = por %p122, %p123
    %p125 = scmp.ne.s32.totalorder %s116, %s117
    %p126 = scmp.eq.s32.totalorder %s17, 0
    %p127 = por %p125, %p126
    %p128 = scmp.ne.s32.totalorder %s116, %s117
    %p129 = scmp.eq.s32.totalorder %s18, 1
    %p130 = por %p128, %p129
    %p132 = scmp.ne.s32.totalorder %s117, %s131
    %p133 = scmp.eq.s32.totalorder %s18, 0
    %p134 = por %p132, %p133
    %s136 = sadd.s32 %s135, 1
    %p139 = scmp.eq.s32.totalorder %s12, 1
    %p140 = scmp.ne.s32.totalorder %s135, %s137
    %p141 = scmp.eq.s32.totalorder %s12, 0
    %p142 = por %p140, %p141
    %p143 = scmp.ne.s32.totalorder %s135, %s137
    %p144 = scmp.eq.s32.totalorder %s17, 1
    %p145 = por %p143, %p144
    %p146 = scmp.ne.s32.totalorder %s137, %s138
    %p147 = scmp.eq.s32.totalorder %s17, 0
    %p148 = por %p146, %p147
    %p149 = scmp.ne.s32.totalorder %s137, %s138
    %p150 = scmp.eq.s32.totalorder %s18, 1
    %p151 = por %p149, %p150
    %p153 = scmp.ne.s32.totalorder %s138, %s152
    %p154 = scmp.eq.s32.totalorder %s18, 0
    %p155 = por %p153, %p154
    %s156 = ssub.s32 %s12, %s19
    %p157 = scmp.eq.s32.totalorder %s156, 0
    %s159 = sadd.s32 %s158, 1
    %s160 = scalar_select %p157, %s158, %s159
    %p163 = pneg %p157
    %p164 = scmp.eq.s32.totalorder %s12, 1
    %p165 = por %p163, %p164
    %p166 = scmp.ne.s32.totalorder %s158, %s161
    %p167 = scmp.eq.s32.totalorder %s12, 0
    %p168 = por %p166, %p167
    %p169 = scmp.ne.s32.totalorder %s158, %s161
    %p170 = scmp.eq.s32.totalorder %s17, 1
    %p171 = por %p169, %p170
    %p172 = scmp.ne.s32.totalorder %s161, %s162
    %p173 = scmp.eq.s32.totalorder %s17, 0
    %p174 = por %p172, %p173
    %p175 = scmp.ne.s32.totalorder %s161, %s162
    %p176 = scmp.eq.s32.totalorder %s18, 1
    %p177 = por %p175, %p176
    %p179 = scmp.ne.s32.totalorder %s162, %s178
    %p180 = scmp.eq.s32.totalorder %s18, 0
    %p181 = por %p179, %p180
    %p182 = scmp.le.s32.totalorder 1, %s12
    %p183 = scmp.lt.s32.totalorder %s12, 3
    %p184 = pnand %p182, %p183
    %p185 = pneg %p184
    // Predicated region
    $region9: #{conv_block_up.3} parent=5 // pred_check
      _
    $region10: #{conv_block_up.3} parent=5 // pred_check_branch
      %187 = sbr.rel (%p184) target = $region12
    $region11: #{conv_block_up.3} parent=5 // pred_region
      %s188 = ssub.s32 %s12, 1
      // Predicated region
      $region13: #{conv_block_up.3} parent=11 // pred_check
        %p189 = pneg %p85
      $region14: #{conv_block_up.3} parent=11 // pred_check_branch
        %191 = sbr.rel (%p189) target = $region16
      $region15: #{conv_block_up.3} parent=11 // pred_region
        _
      $region16: #{conv_block_up.3} parent=11 // pred_fallthru
        _
      // Predicated region
      $region17: #{conv_block_up.3} parent=11 // pred_check
        %p192 = pneg %p106
      $region18: #{conv_block_up.3} parent=11 // pred_check_branch
        %194 = sbr.rel (%p192) target = $region20
      $region19: #{conv_block_up.3} parent=11 // pred_region
        _
      $region20: #{conv_block_up.3} parent=11 // pred_fallthru
        _
      // Predicated region
      $region21: #{conv_block_up.3} parent=11 // pred_check
        %p195 = pneg %p127
      $region22: #{conv_block_up.3} parent=11 // pred_check_branch
        %197 = sbr.rel (%p195) target = $region24
      $region23: #{conv_block_up.3} parent=11 // pred_region
        _
      $region24: #{conv_block_up.3} parent=11 // pred_fallthru
        _
      // Predicated region
      $region25: #{conv_block_up.3} parent=11 // pred_check
        %p198 = pneg %p148
      $region26: #{conv_block_up.3} parent=11 // pred_check_branch
        %200 = sbr.rel (%p198) target = $region28
      $region27: #{conv_block_up.3} parent=11 // pred_region
        _
      $region28: #{conv_block_up.3} parent=11 // pred_fallthru
        _
    $region12: #{conv_block_up.3} parent=5 // pred_fallthru
      _
    %p201 = scmp.lt.s32.totalorder %s12, 2
    // Predicated region
    $region29: #{conv_block_up.3} parent=5 // pred_check
      %p202 = pneg %p201
    $region30: #{conv_block_up.3} parent=5 // pred_check_branch
      %204 = sbr.rel (%p202) target = $region32
    $region31: #{conv_block_up.3} parent=5 // pred_region
      // Predicated region
      $region33: #{conv_block_up.3} parent=31 // pred_check
        %p205 = pneg %p32
      $region34: #{conv_block_up.3} parent=31 // pred_check_branch
        %207 = sbr.rel (%p205) target = $region36
      $region35: #{conv_block_up.3} parent=31 // pred_region
        %p208 = scmp.lt.s32.totalorder %s12, 1
        %s209 = scalar_select %p208, %s12, 1
        %s210 = smul.addr %s209, 8
        %s211 = smul.addr %s210, 4
        %s212 = scalar_lea.vmem %s0, %s211
      $region36: #{conv_block_up.3} parent=31 // pred_fallthru
        _
      // Predicated region
      $region37: #{conv_block_up.3} parent=31 // pred_check
        %p213 = pneg %p58
      $region38: #{conv_block_up.3} parent=31 // pred_check_branch
        %215 = sbr.rel (%p213) target = $region40
      $region39: #{conv_block_up.3} parent=31 // pred_region
        %p216 = scmp.lt.s32.totalorder %s12, 1
        %s217 = scalar_select %p216, %s12, 1
        %s218 = smul.addr %s217, 8
        %s219 = smul.addr %s218, 4
        %s220 = scalar_lea.vmem %s1, %s219
      $region40: #{conv_block_up.3} parent=31 // pred_fallthru
        _
    $region32: #{conv_block_up.3} parent=5 // pred_fallthru
      _
    %p221 = scmp.le.s32.totalorder 1, %s12
    %p222 = scmp.lt.s32.totalorder %s12, 3
    %p223 = pnand %p221, %p222
    %p224 = pneg %p223
    // Predicated region
    $region41: #{conv_block_up.3} parent=5 // pred_check
      _
    $region42: #{conv_block_up.3} parent=5 // pred_check_branch
      %226 = sbr.rel (%p223) target = $region44
    $region43: #{conv_block_up.3} parent=5 // pred_region
      %s227 = ssub.s32 %s12, 1
      %p228 = scmp.lt.s32.totalorder %s17, 1
      %s229 = scalar_select %p228, %s17, 1
      %s230 = smul.addr %s229, 8
      %s231 = smul.addr %s230, 4
      %s232 = scalar_lea.vmem %s0, %s231
      %p233 = pneg %p38
      %p234 = pneg %p35
      %p235 = scmp.lt.s32.totalorder %s17, 1
      %s236 = scalar_select %p235, %s17, 1
      %s237 = smul.addr %s236, 8
      %s238 = smul.addr %s237, 4
      %s239 = scalar_lea.vmem %s1, %s238
      %p240 = pneg %p64
      %p241 = pneg %p61
      %p242 = pneg %p85
      %p243 = pneg %p82
      %p244 = pneg %p106
      %p245 = pneg %p103
      %p246 = pneg %p127
      %p247 = pneg %p124
      %p248 = pneg %p148
      %p249 = pneg %p145
      %p250 = pneg %p174
      %p251 = pneg %p171
      %p252 = scmp.lt.s32.totalorder %s17, 1
      %s253 = scalar_select %p252, %s17, 1
      %s254 = smul.addr %s253, 8
      %s255 = smul.addr %s254, 8
      %s256 = scalar_lea.vmem %s6, %s255
      %p257 = scmp.lt.s32.totalorder %s17, 1
      %s258 = scalar_select %p257, %s17, 1
      %s259 = smul.addr %s258, 8
      %s260 = smul.addr %s259, 4
      %s261 = scalar_lea.vmem %s0, %s260
      %p262 = scmp.lt.s32.totalorder %s17, 1
      %s263 = scalar_select %p262, %s17, 1
      %s264 = smul.addr %s263, 8
      %s265 = smul.addr %s264, 4
      %s266 = scalar_lea.vmem %s1, %s265
      %p267 = scmp.lt.s32.totalorder %s17, 1
      %s268 = scalar_select %p267, %s17, 1
      %s269 = smul.addr %s268, 8
      %s270 = smul.addr %s269, 8
      %s271 = scalar_lea.vmem %s6, %s270
      %v272 = vlaneseq
      %v273 = vand.u32 %v272, 127
      %v274 = vadd.s32 %v273, 128
      %v275 = vadd.s32 %v273, 256
      %v276 = vadd.s32 %v273, 384
      %v277 = vadd.s32 %v273, 512
      %v278 = vadd.s32 %v273, 640
      %v279 = vadd.s32 %v273, 768
      %v280 = vadd.s32 %v273, 896
      %v281 = vand.u32 %v273, 31
      %v282 = vand.u32 %v274, 31
      %v283 = vand.u32 %v275, 31
      %v284 = vand.u32 %v276, 31
      %v285 = vand.u32 %v277, 31
      %v286 = vand.u32 %v278, 31
      %v287 = vand.u32 %v279, 31
      %v288 = vand.u32 %v280, 31
      %v289 = vld [vmem:[%s261] sm:$0xff]
      %v290 = vld [vmem:[%s261 + $0x8] sm:$0xff]
      %v291 = vld [vmem:[%s261 + $0x10] sm:$0xff]
      %v292 = vld [vmem:[%s261 + $0x18] sm:$0xff]
      %v293 = vld [vmem:[%s266] sm:$0xff]
      %v294 = vld [vmem:[%s266 + $0x8] sm:$0xff]
      %v295 = vld [vmem:[%s266 + $0x10] sm:$0xff]
      %v296 = vld [vmem:[%s266 + $0x18] sm:$0xff]
      %v301 = vcombine.high %v289, %v289
      %v302 = vcombine.high %v290, %v290
      %v303 = vcombine.high %v291, %v291
      %v304 = vcombine.high %v292, %v292
      %v313 = vcombine.low %v293, %v293
      %v314 = vcombine.low %v294, %v294
      %v315 = vcombine.low %v295, %v295
      %v316 = vcombine.low %v296, %v296
      %vm321 = vcmask 1043456
      %v322 = vsel %vm321, %v289, %v313
      %v323 = vsel %vm321, %v301, %v293
      %v324 = vsel %vm321, %v290, %v314
      %v325 = vsel %vm321, %v302, %v294
      %v326 = vsel %vm321, %v291, %v315
      %v327 = vsel %vm321, %v303, %v295
      %v328 = vsel %vm321, %v292, %v316
      %v329 = vsel %vm321, %v304, %v296
      %v330 = vld [vmem:[%s2] sm:$0xff]
      %331 = vrot.lane.b32.xlu0 %v322, 33
      %v332 = vpop.permute.xlu0 %331
      %333 = vrot.lane.b32.xlu0 %v323, 33
      %v334 = vpop.permute.xlu0 %333
      %335 = vrot.lane.b32.xlu0 %v324, 33
      %v336 = vpop.permute.xlu0 %335
      %337 = vrot.lane.b32.xlu0 %v325, 33
      %v338 = vpop.permute.xlu0 %337
      %339 = vrot.lane.b32.xlu0 %v326, 33
      %v340 = vpop.permute.xlu0 %339
      %341 = vrot.lane.b32.xlu0 %v327, 33
      %v342 = vpop.permute.xlu0 %341
      %343 = vrot.lane.b32.xlu0 %v328, 33
      %v344 = vpop.permute.xlu0 %343
      %345 = vrot.lane.b32.xlu0 %v329, 33
      %v346 = vpop.permute.xlu0 %345
      %vm347 = vcmp.lt.s32.totalorder %v273, 33
      %v348 = vsel %vm347, %v344, %v346
      %v349 = vsel %vm347, %v342, %v344
      %v350 = vsel %vm347, %v340, %v342
      %v351 = vsel %vm347, %v338, %v340
      %v352 = vsel %vm347, %v336, %v338
      %v353 = vsel %vm347, %v334, %v336
      %v354 = vsel %vm347, %v332, %v334
      %v355 = vsel %vm347, %v346, %v332
      %vm356 = vcmp.ge.s32.totalorder %v273, 32
      %vm357 = vcmp.ge.s32.totalorder %v274, 32
      %vm358 = vcmp.ge.s32.totalorder %v275, 32
      %vm359 = vcmp.ge.s32.totalorder %v276, 32
      %vm360 = vcmp.ge.s32.totalorder %v277, 32
      %vm361 = vcmp.ge.s32.totalorder %v278, 32
      %vm362 = vcmp.ge.s32.totalorder %v279, 32
      %vm363 = vcmp.ge.s32.totalorder %v280, 32
      %vm364 = vcmp.ge.s32.totalorder %v281, 1
      %vm365 = vcmp.ge.s32.totalorder %v282, 1
      %vm366 = vcmp.ge.s32.totalorder %v283, 1
      %vm367 = vcmp.ge.s32.totalorder %v284, 1
      %vm368 = vcmp.ge.s32.totalorder %v285, 1
      %vm369 = vcmp.ge.s32.totalorder %v286, 1
      %vm370 = vcmp.ge.s32.totalorder %v287, 1
      %vm371 = vcmp.ge.s32.totalorder %v288, 1
      %vm372 = vmand %vm356, %vm364
      %vm373 = vmand %vm357, %vm365
      %vm374 = vmand %vm358, %vm366
      %vm375 = vmand %vm359, %vm367
      %vm376 = vmand %vm360, %vm368
      %vm377 = vmand %vm361, %vm369
      %vm378 = vmand %vm362, %vm370
      %vm379 = vmand %vm363, %vm371
      %v380 = vsel %vm372, 1, 0
      %v381 = vsel %vm373, 1, 0
      %v382 = vsel %vm374, 1, 0
      %v383 = vsel %vm375, 1, 0
      %v384 = vsel %vm376, 1, 0
      %v385 = vsel %vm377, 1, 0
      %v386 = vsel %vm378, 1, 0
      %v387 = vsel %vm379, 1, 0
      %v388 = vcvt.s32.f32 %v380
      %v389 = vcvt.s32.f32 %v381
      %v390 = vcvt.s32.f32 %v382
      %v391 = vcvt.s32.f32 %v383
      %v392 = vcvt.s32.f32 %v384
      %v393 = vcvt.s32.f32 %v385
      %v394 = vcvt.s32.f32 %v386
      %v395 = vcvt.s32.f32 %v387
      %v396 = vmul.f32 %v355, %v388
      %v397 = vmul.f32 %v354, %v389
      %v398 = vmul.f32 %v353, %v390
      %v399 = vmul.f32 %v352, %v391
      %v400 = vmul.f32 %v351, %v392
      %v401 = vmul.f32 %v350, %v393
      %v402 = vmul.f32 %v349, %v394
      %v403 = vmul.f32 %v348, %v395
      %404 = vrot.lane.b32.xlu0 %v322, 32
      %v405 = vpop.permute.xlu0 %404
      %406 = vrot.lane.b32.xlu0 %v323, 32
      %v407 = vpop.permute.xlu0 %406
      %408 = vrot.lane.b32.xlu0 %v324, 32
      %v409 = vpop.permute.xlu0 %408
      %410 = vrot.lane.b32.xlu0 %v325, 32
      %v411 = vpop.permute.xlu0 %410
      %412 = vrot.lane.b32.xlu0 %v326, 32
      %v413 = vpop.permute.xlu0 %412
      %414 = vrot.lane.b32.xlu0 %v327, 32
      %v415 = vpop.permute.xlu0 %414
      %416 = vrot.lane.b32.xlu0 %v328, 32
      %v417 = vpop.permute.xlu0 %416
      %418 = vrot.lane.b32.xlu0 %v329, 32
      %v419 = vpop.permute.xlu0 %418
      %vm420 = vcmp.lt.s32.totalorder %v273, 32
      %v421 = vsel %vm420, %v417, %v419
      %v422 = vsel %vm420, %v415, %v417
      %v423 = vsel %vm420, %v413, %v415
      %v424 = vsel %vm420, %v411, %v413
      %v425 = vsel %vm420, %v409, %v411
      %v426 = vsel %vm420, %v407, %v409
      %v427 = vsel %vm420, %v405, %v407
      %v428 = vsel %vm420, %v419, %v405
      %v429 = vsel %vm356, 1, 0
      %v430 = vsel %vm357, 1, 0
      %v431 = vsel %vm358, 1, 0
      %v432 = vsel %vm359, 1, 0
      %v433 = vsel %vm360, 1, 0
      %v434 = vsel %vm361, 1, 0
      %v435 = vsel %vm362, 1, 0
      %v436 = vsel %vm363, 1, 0
      %v437 = vcvt.s32.f32 %v429
      %v438 = vcvt.s32.f32 %v430
      %v439 = vcvt.s32.f32 %v431
      %v440 = vcvt.s32.f32 %v432
      %v441 = vcvt.s32.f32 %v433
      %v442 = vcvt.s32.f32 %v434
      %v443 = vcvt.s32.f32 %v435
      %v444 = vcvt.s32.f32 %v436
      %v445 = vmul.f32 %v428, %v437
      %v446 = vmul.f32 %v427, %v438
      %v447 = vmul.f32 %v426, %v439
      %v448 = vmul.f32 %v425, %v440
      %v449 = vmul.f32 %v424, %v441
      %v450 = vmul.f32 %v423, %v442
      %v451 = vmul.f32 %v422, %v443
      %v452 = vmul.f32 %v421, %v444
      %453 = vrot.lane.b32.xlu0 %v322, 31
      %v454 = vpop.permute.xlu0 %453
      %455 = vrot.lane.b32.xlu0 %v323, 31
      %v456 = vpop.permute.xlu0 %455
      %457 = vrot.lane.b32.xlu0 %v324, 31
      %v458 = vpop.permute.xlu0 %457
      %459 = vrot.lane.b32.xlu0 %v325, 31
      %v460 = vpop.permute.xlu0 %459
      %461 = vrot.lane.b32.xlu0 %v326, 31
      %v462 = vpop.permute.xlu0 %461
      %463 = vrot.lane.b32.xlu0 %v327, 31
      %v464 = vpop.permute.xlu0 %463
      %465 = vrot.lane.b32.xlu0 %v328, 31
      %v466 = vpop.permute.xlu0 %465
      %467 = vrot.lane.b32.xlu0 %v329, 31
      %v468 = vpop.permute.xlu0 %467
      %vm469 = vcmp.lt.s32.totalorder %v273, 31
      %v470 = vsel %vm469, %v466, %v468
      %v471 = vsel %vm469, %v464, %v466
      %v472 = vsel %vm469, %v462, %v464
      %v473 = vsel %vm469, %v460, %v462
      %v474 = vsel %vm469, %v458, %v460
      %v475 = vsel %vm469, %v456, %v458
      %v476 = vsel %vm469, %v454, %v456
      %v477 = vsel %vm469, %v468, %v454
      %vm478 = vcmp.lt.s32.totalorder %v281, 31
      %vm479 = vcmp.lt.s32.totalorder %v282, 31
      %vm480 = vcmp.lt.s32.totalorder %v283, 31
      %vm481 = vcmp.lt.s32.totalorder %v284, 31
      %vm482 = vcmp.lt.s32.totalorder %v285, 31
      %vm483 = vcmp.lt.s32.totalorder %v286, 31
      %vm484 = vcmp.lt.s32.totalorder %v287, 31
      %vm485 = vcmp.lt.s32.totalorder %v288, 31
      %vm486 = vmand %vm356, %vm478
      %vm487 = vmand %vm357, %vm479
      %vm488 = vmand %vm358, %vm480
      %vm489 = vmand %vm359, %vm481
      %vm490 = vmand %vm360, %vm482
      %vm491 = vmand %vm361, %vm483
      %vm492 = vmand %vm362, %vm484
      %vm493 = vmand %vm363, %vm485
      %v494 = vsel %vm486, 1, 0
      %v495 = vsel %vm487, 1, 0
      %v496 = vsel %vm488, 1, 0
      %v497 = vsel %vm489, 1, 0
      %v498 = vsel %vm490, 1, 0
      %v499 = vsel %vm491, 1, 0
      %v500 = vsel %vm492, 1, 0
      %v501 = vsel %vm493, 1, 0
      %v502 = vcvt.s32.f32 %v494
      %v503 = vcvt.s32.f32 %v495
      %v504 = vcvt.s32.f32 %v496
      %v505 = vcvt.s32.f32 %v497
      %v506 = vcvt.s32.f32 %v498
      %v507 = vcvt.s32.f32 %v499
      %v508 = vcvt.s32.f32 %v500
      %v509 = vcvt.s32.f32 %v501
      %v510 = vmul.f32 %v477, %v502
      %v511 = vmul.f32 %v476, %v503
      %v512 = vmul.f32 %v475, %v504
      %v513 = vmul.f32 %v474, %v505
      %v514 = vmul.f32 %v473, %v506
      %v515 = vmul.f32 %v472, %v507
      %v516 = vmul.f32 %v471, %v508
      %v517 = vmul.f32 %v470, %v509
      %518 = vrot.lane.b32.xlu0 %v322, 1
      %v519 = vpop.permute.xlu0 %518
      %520 = vrot.lane.b32.xlu0 %v323, 1
      %v521 = vpop.permute.xlu0 %520
      %522 = vrot.lane.b32.xlu0 %v324, 1
      %v523 = vpop.permute.xlu0 %522
      %524 = vrot.lane.b32.xlu0 %v325, 1
      %v525 = vpop.permute.xlu0 %524
      %526 = vrot.lane.b32.xlu0 %v326, 1
      %v527 = vpop.permute.xlu0 %526
      %528 = vrot.lane.b32.xlu0 %v327, 1
      %v529 = vpop.permute.xlu0 %528
      %530 = vrot.lane.b32.xlu0 %v328, 1
      %v531 = vpop.permute.xlu0 %530
      %532 = vrot.lane.b32.xlu0 %v329, 1
      %v533 = vpop.permute.xlu0 %532
      %vm534 = vcmp.lt.s32.totalorder %v273, 1
      %v535 = vsel %vm534, %v531, %v533
      %v536 = vsel %vm534, %v529, %v531
      %v537 = vsel %vm534, %v527, %v529
      %v538 = vsel %vm534, %v525, %v527
      %v539 = vsel %vm534, %v523, %v525
      %v540 = vsel %vm534, %v521, %v523
      %v541 = vsel %vm534, %v519, %v521
      %v542 = vsel %vm534, %v533, %v519
      %v543 = vsel %vm364, 1, 0
      %v544 = vsel %vm365, 1, 0
      %v545 = vsel %vm366, 1, 0
      %v546 = vsel %vm367, 1, 0
      %v547 = vsel %vm368, 1, 0
      %v548 = vsel %vm369, 1, 0
      %v549 = vsel %vm370, 1, 0
      %v550 = vsel %vm371, 1, 0
      %v551 = vcvt.s32.f32 %v543
      %v552 = vcvt.s32.f32 %v544
      %v553 = vcvt.s32.f32 %v545
      %v554 = vcvt.s32.f32 %v546
      %v555 = vcvt.s32.f32 %v547
      %v556 = vcvt.s32.f32 %v548
      %v557 = vcvt.s32.f32 %v549
      %v558 = vcvt.s32.f32 %v550
      %v559 = vmul.f32 %v542, %v551
      %v560 = vmul.f32 %v541, %v552
      %v561 = vmul.f32 %v540, %v553
      %v562 = vmul.f32 %v539, %v554
      %v563 = vmul.f32 %v538, %v555
      %v564 = vmul.f32 %v537, %v556
      %v565 = vmul.f32 %v536, %v557
      %v566 = vmul.f32 %v535, %v558
      %567 = vrot.lane.b32.xlu0 %v322, 127
      %v568 = vpop.permute.xlu0 %567
      %569 = vrot.lane.b32.xlu0 %v323, 127
      %v570 = vpop.permute.xlu0 %569
      %571 = vrot.lane.b32.xlu0 %v324, 127
      %v572 = vpop.permute.xlu0 %571
      %573 = vrot.lane.b32.xlu0 %v325, 127
      %v574 = vpop.permute.xlu0 %573
      %575 = vrot.lane.b32.xlu0 %v326, 127
      %v576 = vpop.permute.xlu0 %575
      %577 = vrot.lane.b32.xlu0 %v327, 127
      %v578 = vpop.permute.xlu0 %577
      %579 = vrot.lane.b32.xlu0 %v328, 127
      %v580 = vpop.permute.xlu0 %579
      %581 = vrot.lane.b32.xlu0 %v329, 127
      %v582 = vpop.permute.xlu0 %581
      %vm583 = vcmp.lt.s32.totalorder %v273, 127
      %v584 = vsel %vm583, %v580, %v582
      %v585 = vsel %vm583, %v578, %v580
      %v586 = vsel %vm583, %v576, %v578
      %v587 = vsel %vm583, %v574, %v576
      %v588 = vsel %vm583, %v572, %v574
      %v589 = vsel %vm583, %v570, %v572
      %v590 = vsel %vm583, %v568, %v570
      %v591 = vsel %vm583, %v582, %v568
      %v592 = vsel %vm478, 1, 0
      %v593 = vsel %vm479, 1, 0
      %v594 = vsel %vm480, 1, 0
      %v595 = vsel %vm481, 1, 0
      %v596 = vsel %vm482, 1, 0
      %v597 = vsel %vm483, 1, 0
      %v598 = vsel %vm484, 1, 0
      %v599 = vsel %vm485, 1, 0
      %v600 = vcvt.s32.f32 %v592
      %v601 = vcvt.s32.f32 %v593
      %v602 = vcvt.s32.f32 %v594
      %v603 = vcvt.s32.f32 %v595
      %v604 = vcvt.s32.f32 %v596
      %v605 = vcvt.s32.f32 %v597
      %v606 = vcvt.s32.f32 %v598
      %v607 = vcvt.s32.f32 %v599
      %v608 = vmul.f32 %v590, %v600
      %v609 = vmul.f32 %v589, %v601
      %v610 = vmul.f32 %v588, %v602
      %v611 = vmul.f32 %v587, %v603
      %v612 = vmul.f32 %v586, %v604
      %v613 = vmul.f32 %v585, %v605
      %v614 = vmul.f32 %v584, %v606
      %v615 = vmul.f32 %v591, %v607
      %616 = vrot.lane.b32.xlu0 %v322, 97
      %v617 = vpop.permute.xlu0 %616
      %618 = vrot.lane.b32.xlu0 %v323, 97
      %v619 = vpop.permute.xlu0 %618
      %620 = vrot.lane.b32.xlu0 %v324, 97
      %v621 = vpop.permute.xlu0 %620
      %622 = vrot.lane.b32.xlu0 %v325, 97
      %v623 = vpop.permute.xlu0 %622
      %624 = vrot.lane.b32.xlu0 %v326, 97
      %v625 = vpop.permute.xlu0 %624
      %626 = vrot.lane.b32.xlu0 %v327, 97
      %v627 = vpop.permute.xlu0 %626
      %628 = vrot.lane.b32.xlu0 %v328, 97
      %v629 = vpop.permute.xlu0 %628
      %630 = vrot.lane.b32.xlu0 %v329, 97
      %v631 = vpop.permute.xlu0 %630
      %vm632 = vcmp.lt.s32.totalorder %v273, 97
      %v633 = vsel %vm632, %v629, %v631
      %v634 = vsel %vm632, %v627, %v629
      %v635 = vsel %vm632, %v625, %v627
      %v636 = vsel %vm632, %v623, %v625
      %v637 = vsel %vm632, %v621, %v623
      %v638 = vsel %vm632, %v619, %v621
      %v639 = vsel %vm632, %v617, %v619
      %v640 = vsel %vm632, %v631, %v617
      %vm641 = vcmp.lt.s32.totalorder %v273, 992
      %vm642 = vcmp.lt.s32.totalorder %v274, 992
      %vm643 = vcmp.lt.s32.totalorder %v275, 992
      %vm644 = vcmp.lt.s32.totalorder %v276, 992
      %vm645 = vcmp.lt.s32.totalorder %v277, 992
      %vm646 = vcmp.lt.s32.totalorder %v278, 992
      %vm647 = vcmp.lt.s32.totalorder %v279, 992
      %vm648 = vcmp.lt.s32.totalorder %v280, 992
      %vm649 = vmand %vm641, %vm364
      %vm650 = vmand %vm642, %vm365
      %vm651 = vmand %vm643, %vm366
      %vm652 = vmand %vm644, %vm367
      %vm653 = vmand %vm645, %vm368
      %vm654 = vmand %vm646, %vm369
      %vm655 = vmand %vm647, %vm370
      %vm656 = vmand %vm648, %vm371
      %v657 = vsel %vm649, 1, 0
      %v658 = vsel %vm650, 1, 0
      %v659 = vsel %vm651, 1, 0
      %v660 = vsel %vm652, 1, 0
      %v661 = vsel %vm653, 1, 0
      %v662 = vsel %vm654, 1, 0
      %v663 = vsel %vm655, 1, 0
      %v664 = vsel %vm656, 1, 0
      %v665 = vcvt.s32.f32 %v657
      %v666 = vcvt.s32.f32 %v658
      %v667 = vcvt.s32.f32 %v659
      %v668 = vcvt.s32.f32 %v660
      %v669 = vcvt.s32.f32 %v661
      %v670 = vcvt.s32.f32 %v662
      %v671 = vcvt.s32.f32 %v663
      %v672 = vcvt.s32.f32 %v664
      %v673 = vmul.f32 %v639, %v665
      %v674 = vmul.f32 %v638, %v666
      %v675 = vmul.f32 %v637, %v667
      %v676 = vmul.f32 %v636, %v668
      %v677 = vmul.f32 %v635, %v669
      %v678 = vmul.f32 %v634, %v670
      %v679 = vmul.f32 %v633, %v671
      %v680 = vmul.f32 %v640, %v672
      %681 = vrot.lane.b32.xlu0 %v322, 96
      %v682 = vpop.permute.xlu0 %681
      %683 = vrot.lane.b32.xlu0 %v323, 96
      %v684 = vpop.permute.xlu0 %683
      %685 = vrot.lane.b32.xlu0 %v324, 96
      %v686 = vpop.permute.xlu0 %685
      %687 = vrot.lane.b32.xlu0 %v325, 96
      %v688 = vpop.permute.xlu0 %687
      %689 = vrot.lane.b32.xlu0 %v326, 96
      %v690 = vpop.permute.xlu0 %689
      %691 = vrot.lane.b32.xlu0 %v327, 96
      %v692 = vpop.permute.xlu0 %691
      %693 = vrot.lane.b32.xlu0 %v328, 96
      %v694 = vpop.permute.xlu0 %693
      %695 = vrot.lane.b32.xlu0 %v329, 96
      %v696 = vpop.permute.xlu0 %695
      %vm697 = vcmp.lt.s32.totalorder %v273, 96
      %v698 = vsel %vm697, %v694, %v696
      %v699 = vsel %vm697, %v692, %v694
      %v700 = vsel %vm697, %v690, %v692
      %v701 = vsel %vm697, %v688, %v690
      %v702 = vsel %vm697, %v686, %v688
      %v703 = vsel %vm697, %v684, %v686
      %v704 = vsel %vm697, %v682, %v684
      %v705 = vsel %vm697, %v696, %v682
      %v706 = vsel %vm641, 1, 0
      %v707 = vsel %vm642, 1, 0
      %v708 = vsel %vm643, 1, 0
      %v709 = vsel %vm644, 1, 0
      %v710 = vsel %vm645, 1, 0
      %v711 = vsel %vm646, 1, 0
      %v712 = vsel %vm647, 1, 0
      %v713 = vsel %vm648, 1, 0
      %v714 = vcvt.s32.f32 %v706
      %v715 = vcvt.s32.f32 %v707
      %v716 = vcvt.s32.f32 %v708
      %v717 = vcvt.s32.f32 %v709
      %v718 = vcvt.s32.f32 %v710
      %v719 = vcvt.s32.f32 %v711
      %v720 = vcvt.s32.f32 %v712
      %v721 = vcvt.s32.f32 %v713
      %v722 = vmul.f32 %v704, %v714
      %v723 = vmul.f32 %v703, %v715
      %v724 = vmul.f32 %v702, %v716
      %v725 = vmul.f32 %v701, %v717
      %v726 = vmul.f32 %v700, %v718
      %v727 = vmul.f32 %v699, %v719
      %v728 = vmul.f32 %v698, %v720
      %v729 = vmul.f32 %v705, %v721
      %730 = vrot.lane.b32.xlu0 %v322, 95
      %v731 = vpop.permute.xlu0 %730
      %732 = vrot.lane.b32.xlu0 %v323, 95
      %v733 = vpop.permute.xlu0 %732
      %734 = vrot.lane.b32.xlu0 %v324, 95
      %v735 = vpop.permute.xlu0 %734
      %736 = vrot.lane.b32.xlu0 %v325, 95
      %v737 = vpop.permute.xlu0 %736
      %738 = vrot.lane.b32.xlu0 %v326, 95
      %v739 = vpop.permute.xlu0 %738
      %740 = vrot.lane.b32.xlu0 %v327, 95
      %v741 = vpop.permute.xlu0 %740
      %742 = vrot.lane.b32.xlu0 %v328, 95
      %v743 = vpop.permute.xlu0 %742
      %744 = vrot.lane.b32.xlu0 %v329, 95
      %v745 = vpop.permute.xlu0 %744
      %vm746 = vcmp.lt.s32.totalorder %v273, 95
      %v747 = vsel %vm746, %v743, %v745
      %v748 = vsel %vm746, %v741, %v743
      %v749 = vsel %vm746, %v739, %v741
      %v750 = vsel %vm746, %v737, %v739
      %v751 = vsel %vm746, %v735, %v737
      %v752 = vsel %vm746, %v733, %v735
      %v753 = vsel %vm746, %v731, %v733
      %v754 = vsel %vm746, %v745, %v731
      %vm755 = vmand %vm641, %vm478
      %vm756 = vmand %vm642, %vm479
      %vm757 = vmand %vm643, %vm480
      %vm758 = vmand %vm644, %vm481
      %vm759 = vmand %vm645, %vm482
      %vm760 = vmand %vm646, %vm483
      %vm761 = vmand %vm647, %vm484
      %vm762 = vmand %vm648, %vm485
      %v763 = vsel %vm755, 1, 0
      %v764 = vsel %vm756, 1, 0
      %v765 = vsel %vm757, 1, 0
      %v766 = vsel %vm758, 1, 0
      %v767 = vsel %vm759, 1, 0
      %v768 = vsel %vm760, 1, 0
      %v769 = vsel %vm761, 1, 0
      %v770 = vsel %vm762, 1, 0
      %v771 = vcvt.s32.f32 %v763
      %v772 = vcvt.s32.f32 %v764
      %v773 = vcvt.s32.f32 %v765
      %v774 = vcvt.s32.f32 %v766
      %v775 = vcvt.s32.f32 %v767
      %v776 = vcvt.s32.f32 %v768
      %v777 = vcvt.s32.f32 %v769
      %v778 = vcvt.s32.f32 %v770
      %v779 = vmul.f32 %v753, %v771
      %v780 = vmul.f32 %v752, %v772
      %v781 = vmul.f32 %v751, %v773
      %v782 = vmul.f32 %v750, %v774
      %v783 = vmul.f32 %v749, %v775
      %v784 = vmul.f32 %v748, %v776
      %v785 = vmul.f32 %v747, %v777
      %v786 = vmul.f32 %v754, %v778
      %v787 = vld [vmem:[%s3] sm:$0xff]
      %789 = vset.pattern.permute.xlu0 0
      %790 = vperm.xlu0 %789, %v787
      %v791 = vpop.permute.xlu0 %790
      %vm793 = vcmask 588800
      %v795 = vsel %vm793, %v330, 0
      %797 = vmatprep.subr.mxu0 %v397
      %798 = vmatpush1.msra.mxu0 %v396
      %799 = vmatprep.subr.mxu0 %v446
      %800 = vmatpush1.msra.mxu0 %v445
      %801 = vmatprep.subr.mxu0 %v511
      %802 = vmatpush1.msra.mxu0 %v510
      %803 = vmatprep.subr.mxu0 %v560
      %804 = vmatpush1.msra.mxu0 %v559
      %805 = vmatprep.subr.mxu0 %v323
      %806 = vmatpush1.msra.mxu0 %v322
      %807 = vmatprep.subr.mxu0 %v609
      %808 = vmatpush1.msra.mxu0 %v608
      %809 = vmatprep.subr.mxu0 %v674
      %810 = vmatpush1.msra.mxu0 %v673
      %811 = vmatprep.subr.mxu0 %v723
      %812 = vmatpush1.msra.mxu0 %v722
      %813 = vmatprep.subr.mxu0 %v780
      %814 = vmatpush1.msra.mxu0 %v779
      %815 = vmatprep.subr.mxu0 0.0
      %816 = vmatpush1.msra.mxu0 0.0
      %817 = vmatprep.subr.mxu0 0.0
      %818 = vmatpush1.msra.mxu0 0.0
      %819 = vmatprep.subr.mxu0 0.0
      %820 = vmatpush1.msra.mxu0 0.0
      %821 = vmatprep.subr.mxu0 0.0
      %822 = vmatpush1.msra.mxu0 0.0
      %823 = vmatprep.subr.mxu0 0.0
      %824 = vmatpush1.msra.mxu0 0.0
      %825 = vmatprep.subr.mxu0 0.0
      %826 = vmatpush1.msra.mxu0 0.0
      %827 = vmatprep.subr.mxu0 0.0
      %828 = vmatpush1.msra.mxu0 0.0
      %829 = vmatprep.subr.mxu0 0.0
      %830 = vmatpush1.msra.mxu0 0.0
      %831 = vmatprep.subr.mxu0 0.0
      %832 = vmatpush1.msra.mxu0 0.0
      %833 = vmatprep.subr.mxu0 0.0
      %834 = vmatpush1.msra.mxu0 0.0
      %835 = vmatprep.subr.mxu0 0.0
      %836 = vmatpush1.msra.mxu0 0.0
      %837 = vmatprep.subr.mxu0 0.0
      %838 = vmatpush1.msra.mxu0 0.0
      %839 = vmatprep.subr.mxu0 0.0
      %840 = vmatpush1.msra.mxu0 0.0
      %841 = vmatprep.subr.mxu0 0.0
      %842 = vmatpush1.msra.mxu0 0.0
      %843 = vmatprep.subr.mxu0 0.0
      %844 = vmatpush1.msra.mxu0 0.0
      %845 = vmatprep.subr.mxu0 0.0
      %846 = vmatpush1.msra.mxu0 0.0
      %847 = vmatprep.subr.mxu0 0.0
      %848 = vmatpush1.msra.mxu0 0.0
      %849 = vmatprep.subr.mxu0 0.0
      %850 = vmatpush1.msra.mxu0 0.0
      %851 = vmatprep.subr.mxu0 0.0
      %852 = vmatpush1.msra.mxu0 0.0
      %853 = vmatprep.subr.mxu0 0.0
      %854 = vmatpush1.msra.mxu0 0.0
      %855 = vmatprep.subr.mxu0 0.0
      %856 = vmatpush1.msra.mxu0 0.0
      %857 = vmatprep.subr.mxu0 0.0
      %858 = vmatpush1.msra.mxu0 0.0
      %859 = vmatprep.subr.mxu0 0.0
      %860 = vmatpush1.msra.mxu0 0.0
      %861 = vmatprep.mubr.f32.mxu0 0.0
      %862 = vmatmul.mubr.f32.gmra.mrb[0].mxu0 %v795
      %v863 = vpop.f32.mrb[0].mxu0
      %v864 = vadd.f32 %v791, %v863
      %v865 = vpop.f32.mrb[0].mxu0
      %v866 = vadd.f32 %v791, %v865
      %867 = vdwg.mxu0
      %868 = vmatprep.subr.mxu0 %v399
      %869 = vmatpush1.msra.mxu0 %v398
      %870 = vmatprep.subr.mxu0 %v448
      %871 = vmatpush1.msra.mxu0 %v447
      %872 = vmatprep.subr.mxu0 %v513
      %873 = vmatpush1.msra.mxu0 %v512
      %874 = vmatprep.subr.mxu0 %v562
      %875 = vmatpush1.msra.mxu0 %v561
      %876 = vmatprep.subr.mxu0 %v325
      %877 = vmatpush1.msra.mxu0 %v324
      %878 = vmatprep.subr.mxu0 %v611
      %879 = vmatpush1.msra.mxu0 %v610
      %880 = vmatprep.subr.mxu0 %v676
      %881 = vmatpush1.msra.mxu0 %v675
      %882 = vmatprep.subr.mxu0 %v725
      %883 = vmatpush1.msra.mxu0 %v724
      %884 = vmatprep.subr.mxu0 %v782
      %885 = vmatpush1.msra.mxu0 %v781
      %886 = vmatprep.subr.mxu0 0.0
      %887 = vmatpush1.msra.mxu0 0.0
      %888 = vmatprep.subr.mxu0 0.0
      %889 = vmatpush1.msra.mxu0 0.0
      %890 = vmatprep.subr.mxu0 0.0
      %891 = vmatpush1.msra.mxu0 0.0
      %892 = vmatprep.subr.mxu0 0.0
      %893 = vmatpush1.msra.mxu0 0.0
      %894 = vmatprep.subr.mxu0 0.0
      %895 = vmatpush1.msra.mxu0 0.0
      %896 = vmatprep.subr.mxu0 0.0
      %897 = vmatpush1.msra.mxu0 0.0
      %898 = vmatprep.subr.mxu0 0.0
      %899 = vmatpush1.msra.mxu0 0.0
      %900 = vmatprep.subr.mxu0 0.0
      %901 = vmatpush1.msra.mxu0 0.0
      %902 = vmatprep.subr.mxu0 0.0
      %903 = vmatpush1.msra.mxu0 0.0
      %904 = vmatprep.subr.mxu0 0.0
      %905 = vmatpush1.msra.mxu0 0.0
      %906 = vmatprep.subr.mxu0 0.0
      %907 = vmatpush1.msra.mxu0 0.0
      %908 = vmatprep.subr.mxu0 0.0
      %909 = vmatpush1.msra.mxu0 0.0
      %910 = vmatprep.subr.mxu0 0.0
      %911 = vmatpush1.msra.mxu0 0.0
      %912 = vmatprep.subr.mxu0 0.0
      %913 = vmatpush1.msra.mxu0 0.0
      %914 = vmatprep.subr.mxu0 0.0
      %915 = vmatpush1.msra.mxu0 0.0
      %916 = vmatprep.subr.mxu0 0.0
      %917 = vmatpush1.msra.mxu0 0.0
      %918 = vmatprep.subr.mxu0 0.0
      %919 = vmatpush1.msra.mxu0 0.0
      %920 = vmatprep.subr.mxu0 0.0
      %921 = vmatpush1.msra.mxu0 0.0
      %922 = vmatprep.subr.mxu0 0.0
      %923 = vmatpush1.msra.mxu0 0.0
      %924 = vmatprep.subr.mxu0 0.0
      %925 = vmatpush1.msra.mxu0 0.0
      %926 = vmatprep.subr.mxu0 0.0
      %927 = vmatpush1.msra.mxu0 0.0
      %928 = vmatprep.subr.mxu0 0.0
      %929 = vmatpush1.msra.mxu0 0.0
      %930 = vmatprep.subr.mxu0 0.0
      %931 = vmatpush1.msra.mxu0 0.0
      %932 = vmatprep.mubr.f32.mxu0 0.0
      %933 = vmatmul.mubr.f32.gmra.mrb[0].mxu0 %v795
      %v934 = vpop.f32.mrb[0].mxu0
      %v935 = vadd.f32 %v791, %v934
      %v936 = vpop.f32.mrb[0].mxu0
      %v937 = vadd.f32 %v791, %v936
      %938 = vdwg.mxu0
      %939 = vmatprep.subr.mxu0 %v401
      %940 = vmatpush1.msra.mxu0 %v400
      %941 = vmatprep.subr.mxu0 %v450
      %942 = vmatpush1.msra.mxu0 %v449
      %943 = vmatprep.subr.mxu0 %v515
      %944 = vmatpush1.msra.mxu0 %v514
      %945 = vmatprep.subr.mxu0 %v564
      %946 = vmatpush1.msra.mxu0 %v563
      %947 = vmatprep.subr.mxu0 %v327
      %948 = vmatpush1.msra.mxu0 %v326
      %949 = vmatprep.subr.mxu0 %v613
      %950 = vmatpush1.msra.mxu0 %v612
      %951 = vmatprep.subr.mxu0 %v678
      %952 = vmatpush1.msra.mxu0 %v677
      %953 = vmatprep.subr.mxu0 %v727
      %954 = vmatpush1.msra.mxu0 %v726
      %955 = vmatprep.subr.mxu0 %v784
      %956 = vmatpush1.msra.mxu0 %v783
      %957 = vmatprep.subr.mxu0 0.0
      %958 = vmatpush1.msra.mxu0 0.0
      %959 = vmatprep.subr.mxu0 0.0
      %960 = vmatpush1.msra.mxu0 0.0
      %961 = vmatprep.subr.mxu0 0.0
      %962 = vmatpush1.msra.mxu0 0.0
      %963 = vmatprep.subr.mxu0 0.0
      %964 = vmatpush1.msra.mxu0 0.0
      %965 = vmatprep.subr.mxu0 0.0
      %966 = vmatpush1.msra.mxu0 0.0
      %967 = vmatprep.subr.mxu0 0.0
      %968 = vmatpush1.msra.mxu0 0.0
      %969 = vmatprep.subr.mxu0 0.0
      %970 = vmatpush1.msra.mxu0 0.0
      %971 = vmatprep.subr.mxu0 0.0
      %972 = vmatpush1.msra.mxu0 0.0
      %973 = vmatprep.subr.mxu0 0.0
      %974 = vmatpush1.msra.mxu0 0.0
      %975 = vmatprep.subr.mxu0 0.0
      %976 = vmatpush1.msra.mxu0 0.0
      %977 = vmatprep.subr.mxu0 0.0
      %978 = vmatpush1.msra.mxu0 0.0
      %979 = vmatprep.subr.mxu0 0.0
      %980 = vmatpush1.msra.mxu0 0.0
      %981 = vmatprep.subr.mxu0 0.0
      %982 = vmatpush1.msra.mxu0 0.0
      %983 = vmatprep.subr.mxu0 0.0
      %984 = vmatpush1.msra.mxu0 0.0
      %985 = vmatprep.subr.mxu0 0.0
      %986 = vmatpush1.msra.mxu0 0.0
      %987 = vmatprep.subr.mxu0 0.0
      %988 = vmatpush1.msra.mxu0 0.0
      %989 = vmatprep.subr.mxu0 0.0
      %990 = vmatpush1.msra.mxu0 0.0
      %991 = vmatprep.subr.mxu0 0.0
      %992 = vmatpush1.msra.mxu0 0.0
      %993 = vmatprep.subr.mxu0 0.0
      %994 = vmatpush1.msra.mxu0 0.0
      %995 = vmatprep.subr.mxu0 0.0
      %996 = vmatpush1.msra.mxu0 0.0
      %997 = vmatprep.subr.mxu0 0.0
      %998 = vmatpush1.msra.mxu0 0.0
      %999 = vmatprep.subr.mxu0 0.0
      %1000 = vmatpush1.msra.mxu0 0.0
      %1001 = vmatprep.subr.mxu0 0.0
      %1002 = vmatpush1.msra.mxu0 0.0
      %1003 = vmatprep.mubr.f32.mxu0 0.0
      %1004 = vmatmul.mubr.f32.gmra.mrb[0].mxu0 %v795
      %v1005 = vpop.f32.mrb[0].mxu0
      %v1006 = vadd.f32 %v791, %v1005
      %v1007 = vpop.f32.mrb[0].mxu0
      %v1008 = vadd.f32 %v791, %v1007
      %1009 = vdwg.mxu0
      %1010 = vmatprep.subr.mxu0 %v403
      %1011 = vmatpush1.msra.mxu0 %v402
      %1012 = vmatprep.subr.mxu0 %v452
      %1013 = vmatpush1.msra.mxu0 %v451
      %1014 = vmatprep.subr.mxu0 %v517
      %1015 = vmatpush1.msra.mxu0 %v516
      %1016 = vmatprep.subr.mxu0 %v566
      %1017 = vmatpush1.msra.mxu0 %v565
      %1018 = vmatprep.subr.mxu0 %v329
      %1019 = vmatpush1.msra.mxu0 %v328
      %1020 = vmatprep.subr.mxu0 %v615
      %1021 = vmatpush1.msra.mxu0 %v614
      %1022 = vmatprep.subr.mxu0 %v680
      %1023 = vmatpush1.msra.mxu0 %v679
      %1024 = vmatprep.subr.mxu0 %v729
      %1025 = vmatpush1.msra.mxu0 %v728
      %1026 = vmatprep.subr.mxu0 %v786
      %1027 = vmatpush1.msra.mxu0 %v785
      %1028 = vmatprep.subr.mxu0 0.0
      %1029 = vmatpush1.msra.mxu0 0.0
      %1030 = vmatprep.subr.mxu0 0.0
      %1031 = vmatpush1.msra.mxu0 0.0
      %1032 = vmatprep.subr.mxu0 0.0
      %1033 = vmatpush1.msra.mxu0 0.0
      %1034 = vmatprep.subr.mxu0 0.0
      %1035 = vmatpush1.msra.mxu0 0.0
      %1036 = vmatprep.subr.mxu0 0.0
      %1037 = vmatpush1.msra.mxu0 0.0
      %1038 = vmatprep.subr.mxu0 0.0
      %1039 = vmatpush1.msra.mxu0 0.0
      %1040 = vmatprep.subr.mxu0 0.0
      %1041 = vmatpush1.msra.mxu0 0.0
      %1042 = vmatprep.subr.mxu0 0.0
      %1043 = vmatpush1.msra.mxu0 0.0
      %1044 = vmatprep.subr.mxu0 0.0
      %1045 = vmatpush1.msra.mxu0 0.0
      %1046 = vmatprep.subr.mxu0 0.0
      %1047 = vmatpush1.msra.mxu0 0.0
      %1048 = vmatprep.subr.mxu0 0.0
      %1049 = vmatpush1.msra.mxu0 0.0
      %1050 = vmatprep.subr.mxu0 0.0
      %1051 = vmatpush1.msra.mxu0 0.0
      %1052 = vmatprep.subr.mxu0 0.0
      %1053 = vmatpush1.msra.mxu0 0.0
      %1054 = vmatprep.subr.mxu0 0.0
      %1055 = vmatpush1.msra.mxu0 0.0
      %1056 = vmatprep.subr.mxu0 0.0
      %1057 = vmatpush1.msra.mxu0 0.0
      %1058 = vmatprep.subr.mxu0 0.0
      %1059 = vmatpush1.msra.mxu0 0.0
      %1060 = vmatprep.subr.mxu0 0.0
      %1061 = vmatpush1.msra.mxu0 0.0
      %1062 = vmatprep.subr.mxu0 0.0
      %1063 = vmatpush1.msra.mxu0 0.0
      %1064 = vmatprep.subr.mxu0 0.0
      %1065 = vmatpush1.msra.mxu0 0.0
      %1066 = vmatprep.subr.mxu0 0.0
      %1067 = vmatpush1.msra.mxu0 0.0
      %1068 = vmatprep.subr.mxu0 0.0
      %1069 = vmatpush1.msra.mxu0 0.0
      %1070 = vmatprep.subr.mxu0 0.0
      %1071 = vmatpush1.msra.mxu0 0.0
      %1072 = vmatprep.subr.mxu0 0.0
      %1073 = vmatpush1.msra.mxu0 0.0
      %1074 = vmatprep.mubr.f32.mxu0 0.0
      %1075 = vmatmul.mubr.f32.gmra.mrb[0].mxu0 %v795
      %v1076 = vpop.f32.mrb[0].mxu0
      %v1077 = vadd.f32 %v791, %v1076
      %v1078 = vpop.f32.mrb[0].mxu0
      %v1079 = vadd.f32 %v791, %v1078
      %1080 = vdwg.mxu0
      %v1081 = vmax.f32 %v864, 0.0
      %v1082 = vmax.f32 %v866, 0.0
      %v1083 = vmax.f32 %v935, 0.0
      %v1084 = vmax.f32 %v937, 0.0
      %v1085 = vmax.f32 %v1006, 0.0
      %v1086 = vmax.f32 %v1008, 0.0
      %v1087 = vmax.f32 %v1077, 0.0
      %v1088 = vmax.f32 %v1079, 0.0
      %v1089 = vld [vmem:[%s4] sm:$0xff]
      %1090 = vrot.lane.b32.xlu0 %v1081, 33
      %v1091 = vpop.permute.xlu0 %1090
      %1092 = vrot.lane.b32.xlu0 %v1082, 33
      %v1093 = vpop.permute.xlu0 %1092
      %1094 = vrot.lane.b32.xlu0 %v1083, 33
      %v1095 = vpop.permute.xlu0 %1094
      %1096 = vrot.lane.b32.xlu0 %v1084, 33
      %v1097 = vpop.permute.xlu0 %1096
      %1098 = vrot.lane.b32.xlu0 %v1085, 33
      %v1099 = vpop.permute.xlu0 %1098
      %1100 = vrot.lane.b32.xlu0 %v1086, 33
      %v1101 = vpop.permute.xlu0 %1100
      %1102 = vrot.lane.b32.xlu0 %v1087, 33
      %v1103 = vpop.permute.xlu0 %1102
      %1104 = vrot.lane.b32.xlu0 %v1088, 33
      %v1105 = vpop.permute.xlu0 %1104
      %v1106 = vsel %vm347, %v1103, %v1105
      %v1107 = vsel %vm347, %v1101, %v1103
      %v1108 = vsel %vm347, %v1099, %v1101
      %v1109 = vsel %vm347, %v1097, %v1099
      %v1110 = vsel %vm347, %v1095, %v1097
      %v1111 = vsel %vm347, %v1093, %v1095
      %v1112 = vsel %vm347, %v1091, %v1093
      %v1113 = vsel %vm347, %v1105, %v1091
      %v1114 = vmul.f32 %v1113, %v388
      %v1115 = vmul.f32 %v1112, %v389
      %v1116 = vmul.f32 %v1111, %v390
      %v1117 = vmul.f32 %v1110, %v391
      %v1118 = vmul.f32 %v1109, %v392
      %v1119 = vmul.f32 %v1108, %v393
      %v1120 = vmul.f32 %v1107, %v394
      %v1121 = vmul.f32 %v1106, %v395
      %1122 = vrot.lane.b32.xlu0 %v1081, 32
      %v1123 = vpop.permute.xlu0 %1122
      %1124 = vrot.lane.b32.xlu0 %v1082, 32
      %v1125 = vpop.permute.xlu0 %1124
      %1126 = vrot.lane.b32.xlu0 %v1083, 32
      %v1127 = vpop.permute.xlu0 %1126
      %1128 = vrot.lane.b32.xlu0 %v1084, 32
      %v1129 = vpop.permute.xlu0 %1128
      %1130 = vrot.lane.b32.xlu0 %v1085, 32
      %v1131 = vpop.permute.xlu0 %1130
      %1132 = vrot.lane.b32.xlu0 %v1086, 32
      %v1133 = vpop.permute.xlu0 %1132
      %1134 = vrot.lane.b32.xlu0 %v1087, 32
      %v1135 = vpop.permute.xlu0 %1134
      %1136 = vrot.lane.b32.xlu0 %v1088, 32
      %v1137 = vpop.permute.xlu0 %1136
      %v1138 = vsel %vm420, %v1135, %v1137
      %v1139 = vsel %vm420, %v1133, %v1135
      %v1140 = vsel %vm420, %v1131, %v1133
      %v1141 = vsel %vm420, %v1129, %v1131
      %v1142 = vsel %vm420, %v1127, %v1129
      %v1143 = vsel %vm420, %v1125, %v1127
      %v1144 = vsel %vm420, %v1123, %v1125
      %v1145 = vsel %vm420, %v1137, %v1123
      %v1146 = vmul.f32 %v1145, %v437
      %v1147 = vmul.f32 %v1144, %v438
      %v1148 = vmul.f32 %v1143, %v439
      %v1149 = vmul.f32 %v1142, %v440
      %v1150 = vmul.f32 %v1141, %v441
      %v1151 = vmul.f32 %v1140, %v442
      %v1152 = vmul.f32 %v1139, %v443
      %v1153 = vmul.f32 %v1138, %v444
      %1154 = vrot.lane.b32.xlu0 %v1081, 31
      %v1155 = vpop.permute.xlu0 %1154
      %1156 = vrot.lane.b32.xlu0 %v1082, 31
      %v1157 = vpop.permute.xlu0 %1156
      %1158 = vrot.lane.b32.xlu0 %v1083, 31
      %v1159 = vpop.permute.xlu0 %1158
      %1160 = vrot.lane.b32.xlu0 %v1084, 31
      %v1161 = vpop.permute.xlu0 %1160
      %1162 = vrot.lane.b32.xlu0 %v1085, 31
      %v1163 = vpop.permute.xlu0 %1162
      %1164 = vrot.lane.b32.xlu0 %v1086, 31
      %v1165 = vpop.permute.xlu0 %1164
      %1166 = vrot.lane.b32.xlu0 %v1087, 31
      %v1167 = vpop.permute.xlu0 %1166
      %1168 = vrot.lane.b32.xlu0 %v1088, 31
      %v1169 = vpop.permute.xlu0 %1168
      %v1170 = vsel %vm469, %v1167, %v1169
      %v1171 = vsel %vm469, %v1165, %v1167
      %v1172 = vsel %vm469, %v1163, %v1165
      %v1173 = vsel %vm469, %v1161, %v1163
      %v1174 = vsel %vm469, %v1159, %v1161
      %v1175 = vsel %vm469, %v1157, %v1159
      %v1176 = vsel %vm469, %v1155, %v1157
      %v1177 = vsel %vm469, %v1169, %v1155
      %v1178 = vmul.f32 %v1177, %v502
      %v1179 = vmul.f32 %v1176, %v503
      %v1180 = vmul.f32 %v1175, %v504
      %v1181 = vmul.f32 %v1174, %v505
      %v1182 = vmul.f32 %v1173, %v506
      %v1183 = vmul.f32 %v1172, %v507
      %v1184 = vmul.f32 %v1171, %v508
      %v1185 = vmul.f32 %v1170, %v509
      %1186 = vrot.lane.b32.xlu0 %v1081, 1
      %v1187 = vpop.permute.xlu0 %1186
      %1188 = vrot.lane.b32.xlu0 %v1082, 1
      %v1189 = vpop.permute.xlu0 %1188
      %1190 = vrot.lane.b32.xlu0 %v1083, 1
      %v1191 = vpop.permute.xlu0 %1190
      %1192 = vrot.lane.b32.xlu0 %v1084, 1
      %v1193 = vpop.permute.xlu0 %1192
      %1194 = vrot.lane.b32.xlu0 %v1085, 1
      %v1195 = vpop.permute.xlu0 %1194
      %1196 = vrot.lane.b32.xlu0 %v1086, 1
      %v1197 = vpop.permute.xlu0 %1196
      %1198 = vrot.lane.b32.xlu0 %v1087, 1
      %v1199 = vpop.permute.xlu0 %1198
      %1200 = vrot.lane.b32.xlu0 %v1088, 1
      %v1201 = vpop.permute.xlu0 %1200
      %v1202 = vsel %vm534, %v1199, %v1201
      %v1203 = vsel %vm534, %v1197, %v1199
      %v1204 = vsel %vm534, %v1195, %v1197
      %v1205 = vsel %vm534, %v1193, %v1195
      %v1206 = vsel %vm534, %v1191, %v1193
      %v1207 = vsel %vm534, %v1189, %v1191
      %v1208 = vsel %vm534, %v1187, %v1189
      %v1209 = vsel %vm534, %v1201, %v1187
      %v1210 = vmul.f32 %v1209, %v551
      %v1211 = vmul.f32 %v1208, %v552
      %v1212 = vmul.f32 %v1207, %v553
      %v1213 = vmul.f32 %v1206, %v554
      %v1214 = vmul.f32 %v1205, %v555
      %v1215 = vmul.f32 %v1204, %v556
      %v1216 = vmul.f32 %v1203, %v557
      %v1217 = vmul.f32 %v1202, %v558
      %1218 = vrot.lane.b32.xlu0 %v1081, 127
      %v1219 = vpop.permute.xlu0 %1218
      %1220 = vrot.lane.b32.xlu0 %v1082, 127
      %v1221 = vpop.permute.xlu0 %1220
      %1222 = vrot.lane.b32.xlu0 %v1083, 127
      %v1223 = vpop.permute.xlu0 %1222
      %1224 = vrot.lane.b32.xlu0 %v1084, 127
      %v1225 = vpop.permute.xlu0 %1224
      %1226 = vrot.lane.b32.xlu0 %v1085, 127
      %v1227 = vpop.permute.xlu0 %1226
      %1228 = vrot.lane.b32.xlu0 %v1086, 127
      %v1229 = vpop.permute.xlu0 %1228
      %1230 = vrot.lane.b32.xlu0 %v1087, 127
      %v1231 = vpop.permute.xlu0 %1230
      %1232 = vrot.lane.b32.xlu0 %v1088, 127
      %v1233 = vpop.permute.xlu0 %1232
      %v1234 = vsel %vm583, %v1231, %v1233
      %v1235 = vsel %vm583, %v1229, %v1231
      %v1236 = vsel %vm583, %v1227, %v1229
      %v1237 = vsel %vm583, %v1225, %v1227
      %v1238 = vsel %vm583, %v1223, %v1225
      %v1239 = vsel %vm583, %v1221, %v1223
      %v1240 = vsel %vm583, %v1219, %v1221
      %v1241 = vsel %vm583, %v1233, %v1219
      %v1242 = vmul.f32 %v1240, %v600
      %v1243 = vmul.f32 %v1239, %v601
      %v1244 = vmul.f32 %v1238, %v602
      %v1245 = vmul.f32 %v1237, %v603
      %v1246 = vmul.f32 %v1236, %v604
      %v1247 = vmul.f32 %v1235, %v605
      %v1248 = vmul.f32 %v1234, %v606
      %v1249 = vmul.f32 %v1241, %v607
      %1250 = vrot.lane.b32.xlu0 %v1081, 97
      %v1251 = vpop.permute.xlu0 %1250
      %1252 = vrot.lane.b32.xlu0 %v1082, 97
      %v1253 = vpop.permute.xlu0 %1252
      %1254 = vrot.lane.b32.xlu0 %v1083, 97
      %v1255 = vpop.permute.xlu0 %1254
      %1256 = vrot.lane.b32.xlu0 %v1084, 97
      %v1257 = vpop.permute.xlu0 %1256
      %1258 = vrot.lane.b32.xlu0 %v1085, 97
      %v1259 = vpop.permute.xlu0 %1258
      %1260 = vrot.lane.b32.xlu0 %v1086, 97
      %v1261 = vpop.permute.xlu0 %1260
      %1262 = vrot.lane.b32.xlu0 %v1087, 97
      %v1263 = vpop.permute.xlu0 %1262
      %1264 = vrot.lane.b32.xlu0 %v1088, 97
      %v1265 = vpop.permute.xlu0 %1264
      %v1266 = vsel %vm632, %v1263, %v1265
      %v1267 = vsel %vm632, %v1261, %v1263
      %v1268 = vsel %vm632, %v1259, %v1261
      %v1269 = vsel %vm632, %v1257, %v1259
      %v1270 = vsel %vm632, %v1255, %v1257
      %v1271 = vsel %vm632, %v1253, %v1255
      %v1272 = vsel %vm632, %v1251, %v1253
      %v1273 = vsel %vm632, %v1265, %v1251
      %v1274 = vmul.f32 %v1272, %v665
      %v1275 = vmul.f32 %v1271, %v666
      %v1276 = vmul.f32 %v1270, %v667
      %v1277 = vmul.f32 %v1269, %v668
      %v1278 = vmul.f32 %v1268, %v669
      %v1279 = vmul.f32 %v1267, %v670
      %v1280 = vmul.f32 %v1266, %v671
      %v1281 = vmul.f32 %v1273, %v672
      %1282 = vrot.lane.b32.xlu0 %v1081, 96
      %v1283 = vpop.permute.xlu0 %1282
      %1284 = vrot.lane.b32.xlu0 %v1082, 96
      %v1285 = vpop.permute.xlu0 %1284
      %1286 = vrot.lane.b32.xlu0 %v1083, 96
      %v1287 = vpop.permute.xlu0 %1286
      %1288 = vrot.lane.b32.xlu0 %v1084, 96
      %v1289 = vpop.permute.xlu0 %1288
      %1290 = vrot.lane.b32.xlu0 %v1085, 96
      %v1291 = vpop.permute.xlu0 %1290
      %1292 = vrot.lane.b32.xlu0 %v1086, 96
      %v1293 = vpop.permute.xlu0 %1292
      %1294 = vrot.lane.b32.xlu0 %v1087, 96
      %v1295 = vpop.permute.xlu0 %1294
      %1296 = vrot.lane.b32.xlu0 %v1088, 96
      %v1297 = vpop.permute.xlu0 %1296
      %v1298 = vsel %vm697, %v1295, %v1297
      %v1299 = vsel %vm697, %v1293, %v1295
      %v1300 = vsel %vm697, %v1291, %v1293
      %v1301 = vsel %vm697, %v1289, %v1291
      %v1302 = vsel %vm697, %v1287, %v1289
      %v1303 = vsel %vm697, %v1285, %v1287
      %v1304 = vsel %vm697, %v1283, %v1285
      %v1305 = vsel %vm697, %v1297, %v1283
      %v1306 = vmul.f32 %v1304, %v714
      %v1307 = vmul.f32 %v1303, %v715
      %v1308 = vmul.f32 %v1302, %v716
      %v1309 = vmul.f32 %v1301, %v717
      %v1310 = vmul.f32 %v1300, %v718
      %v1311 = vmul.f32 %v1299, %v719
      %v1312 = vmul.f32 %v1298, %v720
      %v1313 = vmul.f32 %v1305, %v721
      %1314 = vrot.lane.b32.xlu0 %v1081, 95
      %v1315 = vpop.permute.xlu0 %1314
      %1316 = vrot.lane.b32.xlu0 %v1082, 95
      %v1317 = vpop.permute.xlu0 %1316
      %1318 = vrot.lane.b32.xlu0 %v1083, 95
      %v1319 = vpop.permute.xlu0 %1318
      %1320 = vrot.lane.b32.xlu0 %v1084, 95
      %v1321 = vpop.permute.xlu0 %1320
      %1322 = vrot.lane.b32.xlu0 %v1085, 95
      %v1323 = vpop.permute.xlu0 %1322
      %1324 = vrot.lane.b32.xlu0 %v1086, 95
      %v1325 = vpop.permute.xlu0 %1324
      %1326 = vrot.lane.b32.xlu0 %v1087, 95
      %v1327 = vpop.permute.xlu0 %1326
      %1328 = vrot.lane.b32.xlu0 %v1088, 95
      %v1329 = vpop.permute.xlu0 %1328
      %v1330 = vsel %vm746, %v1327, %v1329
      %v1331 = vsel %vm746, %v1325, %v1327
      %v1332 = vsel %vm746, %v1323, %v1325
      %v1333 = vsel %vm746, %v1321, %v1323
      %v1334 = vsel %vm746, %v1319, %v1321
      %v1335 = vsel %vm746, %v1317, %v1319
      %v1336 = vsel %vm746, %v1315, %v1317
      %v1337 = vsel %vm746, %v1329, %v1315
      %v1338 = vmul.f32 %v1336, %v771
      %v1339 = vmul.f32 %v1335, %v772
      %v1340 = vmul.f32 %v1334, %v773
      %v1341 = vmul.f32 %v1333, %v774
      %v1342 = vmul.f32 %v1332, %v775
      %v1343 = vmul.f32 %v1331, %v776
      %v1344 = vmul.f32 %v1330, %v777
      %v1345 = vmul.f32 %v1337, %v778
      %v1346 = vld [vmem:[%s5] sm:$0xff]
      %1348 = vset.pattern.permute.xlu0 0
      %1349 = vperm.xlu0 %1348, %v1346
      %v1350 = vpop.permute.xlu0 %1349
      %v1353 = vsel %vm793, %v1089, 0
      %1355 = vmatprep.subr.mxu0 %v1115
      %1356 = vmatpush1.msra.mxu0 %v1114
      %1357 = vmatprep.subr.mxu0 %v1147
      %1358 = vmatpush1.msra.mxu0 %v1146
      %1359 = vmatprep.subr.mxu0 %v1179
      %1360 = vmatpush1.msra.mxu0 %v1178
      %1361 = vmatprep.subr.mxu0 %v1211
      %1362 = vmatpush1.msra.mxu0 %v1210
      %1363 = vmatprep.subr.mxu0 %v1082
      %1364 = vmatpush1.msra.mxu0 %v1081
      %1365 = vmatprep.subr.mxu0 %v1243
      %1366 = vmatpush1.msra.mxu0 %v1242
      %1367 = vmatprep.subr.mxu0 %v1275
      %1368 = vmatpush1.msra.mxu0 %v1274
      %1369 = vmatprep.subr.mxu0 %v1307
      %1370 = vmatpush1.msra.mxu0 %v1306
      %1371 = vmatprep.subr.mxu0 %v1339
      %1372 = vmatpush1.msra.mxu0 %v1338
      %1373 = vmatprep.subr.mxu0 0.0
      %1374 = vmatpush1.msra.mxu0 0.0
      %1375 = vmatprep.subr.mxu0 0.0
      %1376 = vmatpush1.msra.mxu0 0.0
      %1377 = vmatprep.subr.mxu0 0.0
      %1378 = vmatpush1.msra.mxu0 0.0
      %1379 = vmatprep.subr.mxu0 0.0
      %1380 = vmatpush1.msra.mxu0 0.0
      %1381 = vmatprep.subr.mxu0 0.0
      %1382 = vmatpush1.msra.mxu0 0.0
      %1383 = vmatprep.subr.mxu0 0.0
      %1384 = vmatpush1.msra.mxu0 0.0
      %1385 = vmatprep.subr.mxu0 0.0
      %1386 = vmatpush1.msra.mxu0 0.0
      %1387 = vmatprep.subr.mxu0 0.0
      %1388 = vmatpush1.msra.mxu0 0.0
      %1389 = vmatprep.subr.mxu0 0.0
      %1390 = vmatpush1.msra.mxu0 0.0
      %1391 = vmatprep.subr.mxu0 0.0
      %1392 = vmatpush1.msra.mxu0 0.0
      %1393 = vmatprep.subr.mxu0 0.0
      %1394 = vmatpush1.msra.mxu0 0.0
      %1395 = vmatprep.subr.mxu0 0.0
      %1396 = vmatpush1.msra.mxu0 0.0
      %1397 = vmatprep.subr.mxu0 0.0
      %1398 = vmatpush1.msra.mxu0 0.0
      %1399 = vmatprep.subr.mxu0 0.0
      %1400 = vmatpush1.msra.mxu0 0.0
      %1401 = vmatprep.subr.mxu0 0.0
      %1402 = vmatpush1.msra.mxu0 0.0
      %1403 = vmatprep.subr.mxu0 0.0
      %1404 = vmatpush1.msra.mxu0 0.0
      %1405 = vmatprep.subr.mxu0 0.0
      %1406 = vmatpush1.msra.mxu0 0.0
      %1407 = vmatprep.subr.mxu0 0.0
      %1408 = vmatpush1.msra.mxu0 0.0
      %1409 = vmatprep.subr.mxu0 0.0
      %1410 = vmatpush1.msra.mxu0 0.0
      %1411 = vmatprep.subr.mxu0 0.0
      %1412 = vmatpush1.msra.mxu0 0.0
      %1413 = vmatprep.subr.mxu0 0.0
      %1414 = vmatpush1.msra.mxu0 0.0
      %1415 = vmatprep.subr.mxu0 0.0
      %1416 = vmatpush1.msra.mxu0 0.0
      %1417 = vmatprep.subr.mxu0 0.0
      %1418 = vmatpush1.msra.mxu0 0.0
      %1419 = vmatprep.mubr.f32.mxu0 0.0
      %1420 = vmatmul.mubr.f32.gmra.mrb[0].mxu0 %v1353
      %v1421 = vpop.f32.mrb[0].mxu0
      %v1422 = vadd.f32 %v1350, %v1421
      %v1423 = vpop.f32.mrb[0].mxu0
      %v1424 = vadd.f32 %v1350, %v1423
      %1425 = vdwg.mxu0
      %1426 = vmatprep.subr.mxu0 %v1117
      %1427 = vmatpush1.msra.mxu0 %v1116
      %1428 = vmatprep.subr.mxu0 %v1149
      %1429 = vmatpush1.msra.mxu0 %v1148
      %1430 = vmatprep.subr.mxu0 %v1181
      %1431 = vmatpush1.msra.mxu0 %v1180
      %1432 = vmatprep.subr.mxu0 %v1213
      %1433 = vmatpush1.msra.mxu0 %v1212
      %1434 = vmatprep.subr.mxu0 %v1084
      %1435 = vmatpush1.msra.mxu0 %v1083
      %1436 = vmatprep.subr.mxu0 %v1245
      %1437 = vmatpush1.msra.mxu0 %v1244
      %1438 = vmatprep.subr.mxu0 %v1277
      %1439 = vmatpush1.msra.mxu0 %v1276
      %1440 = vmatprep.subr.mxu0 %v1309
      %1441 = vmatpush1.msra.mxu0 %v1308
      %1442 = vmatprep.subr.mxu0 %v1341
      %1443 = vmatpush1.msra.mxu0 %v1340
      %1444 = vmatprep.subr.mxu0 0.0
      %1445 = vmatpush1.msra.mxu0 0.0
      %1446 = vmatprep.subr.mxu0 0.0
      %1447 = vmatpush1.msra.mxu0 0.0
      %1448 = vmatprep.subr.mxu0 0.0
      %1449 = vmatpush1.msra.mxu0 0.0
      %1450 = vmatprep.subr.mxu0 0.0
      %1451 = vmatpush1.msra.mxu0 0.0
      %1452 = vmatprep.subr.mxu0 0.0
      %1453 = vmatpush1.msra.mxu0 0.0
      %1454 = vmatprep.subr.mxu0 0.0
      %1455 = vmatpush1.msra.mxu0 0.0
      %1456 = vmatprep.subr.mxu0 0.0
      %1457 = vmatpush1.msra.mxu0 0.0
      %1458 = vmatprep.subr.mxu0 0.0
      %1459 = vmatpush1.msra.mxu0 0.0
      %1460 = vmatprep.subr.mxu0 0.0
      %1461 = vmatpush1.msra.mxu0 0.0
      %1462 = vmatprep.subr.mxu0 0.0
      %1463 = vmatpush1.msra.mxu0 0.0
      %1464 = vmatprep.subr.mxu0 0.0
      %1465 = vmatpush1.msra.mxu0 0.0
      %1466 = vmatprep.subr.mxu0 0.0
      %1467 = vmatpush1.msra.mxu0 0.0
      %1468 = vmatprep.subr.mxu0 0.0
      %1469 = vmatpush1.msra.mxu0 0.0
      %1470 = vmatprep.subr.mxu0 0.0
      %1471 = vmatpush1.msra.mxu0 0.0
      %1472 = vmatprep.subr.mxu0 0.0
      %1473 = vmatpush1.msra.mxu0 0.0
      %1474 = vmatprep.subr.mxu0 0.0
      %1475 = vmatpush1.msra.mxu0 0.0
      %1476 = vmatprep.subr.mxu0 0.0
      %1477 = vmatpush1.msra.mxu0 0.0
      %1478 = vmatprep.subr.mxu0 0.0
      %1479 = vmatpush1.msra.mxu0 0.0
      %1480 = vmatprep.subr.mxu0 0.0
      %1481 = vmatpush1.msra.mxu0 0.0
      %1482 = vmatprep.subr.mxu0 0.0
      %1483 = vmatpush1.msra.mxu0 0.0
      %1484 = vmatprep.subr.mxu0 0.0
      %1485 = vmatpush1.msra.mxu0 0.0
      %1486 = vmatprep.subr.mxu0 0.0
      %1487 = vmatpush1.msra.mxu0 0.0
      %1488 = vmatprep.subr.mxu0 0.0
      %1489 = vmatpush1.msra.mxu0 0.0
      %1490 = vmatprep.mubr.f32.mxu0 0.0
      %1491 = vmatmul.mubr.f32.gmra.mrb[0].mxu0 %v1353
      %v1492 = vpop.f32.mrb[0].mxu0
      %v1493 = vadd.f32 %v1350, %v1492
      %v1494 = vpop.f32.mrb[0].mxu0
      %v1495 = vadd.f32 %v1350, %v1494
      %1496 = vdwg.mxu0
      %1497 = vmatprep.subr.mxu0 %v1119
      %1498 = vmatpush1.msra.mxu0 %v1118
      %1499 = vmatprep.subr.mxu0 %v1151
      %1500 = vmatpush1.msra.mxu0 %v1150
      %1501 = vmatprep.subr.mxu0 %v1183
      %1502 = vmatpush1.msra.mxu0 %v1182
      %1503 = vmatprep.subr.mxu0 %v1215
      %1504 = vmatpush1.msra.mxu0 %v1214
      %1505 = vmatprep.subr.mxu0 %v1086
      %1506 = vmatpush1.msra.mxu0 %v1085
      %1507 = vmatprep.subr.mxu0 %v1247
      %1508 = vmatpush1.msra.mxu0 %v1246
      %1509 = vmatprep.subr.mxu0 %v1279
      %1510 = vmatpush1.msra.mxu0 %v1278
      %1511 = vmatprep.subr.mxu0 %v1311
      %1512 = vmatpush1.msra.mxu0 %v1310
      %1513 = vmatprep.subr.mxu0 %v1343
      %1514 = vmatpush1.msra.mxu0 %v1342
      %1515 = vmatprep.subr.mxu0 0.0
      %1516 = vmatpush1.msra.mxu0 0.0
      %1517 = vmatprep.subr.mxu0 0.0
      %1518 = vmatpush1.msra.mxu0 0.0
      %1519 = vmatprep.subr.mxu0 0.0
      %1520 = vmatpush1.msra.mxu0 0.0
      %1521 = vmatprep.subr.mxu0 0.0
      %1522 = vmatpush1.msra.mxu0 0.0
      %1523 = vmatprep.subr.mxu0 0.0
      %1524 = vmatpush1.msra.mxu0 0.0
      %1525 = vmatprep.subr.mxu0 0.0
      %1526 = vmatpush1.msra.mxu0 0.0
      %1527 = vmatprep.subr.mxu0 0.0
      %1528 = vmatpush1.msra.mxu0 0.0
      %1529 = vmatprep.subr.mxu0 0.0
      %1530 = vmatpush1.msra.mxu0 0.0
      %1531 = vmatprep.subr.mxu0 0.0
      %1532 = vmatpush1.msra.mxu0 0.0
      %1533 = vmatprep.subr.mxu0 0.0
      %1534 = vmatpush1.msra.mxu0 0.0
      %1535 = vmatprep.subr.mxu0 0.0
      %1536 = vmatpush1.msra.mxu0 0.0
      %1537 = vmatprep.subr.mxu0 0.0
      %1538 = vmatpush1.msra.mxu0 0.0
      %1539 = vmatprep.subr.mxu0 0.0
      %1540 = vmatpush1.msra.mxu0 0.0
      %1541 = vmatprep.subr.mxu0 0.0
      %1542 = vmatpush1.msra.mxu0 0.0
      %1543 = vmatprep.subr.mxu0 0.0
      %1544 = vmatpush1.msra.mxu0 0.0
      %1545 = vmatprep.subr.mxu0 0.0
      %1546 = vmatpush1.msra.mxu0 0.0
      %1547 = vmatprep.subr.mxu0 0.0
      %1548 = vmatpush1.msra.mxu0 0.0
      %1549 = vmatprep.subr.mxu0 0.0
      %1550 = vmatpush1.msra.mxu0 0.0
      %1551 = vmatprep.subr.mxu0 0.0
      %1552 = vmatpush1.msra.mxu0 0.0
      %1553 = vmatprep.subr.mxu0 0.0
      %1554 = vmatpush1.msra.mxu0 0.0
      %1555 = vmatprep.subr.mxu0 0.0
      %1556 = vmatpush1.msra.mxu0 0.0
      %1557 = vmatprep.subr.mxu0 0.0
      %1558 = vmatpush1.msra.mxu0 0.0
      %1559 = vmatprep.subr.mxu0 0.0
      %1560 = vmatpush1.msra.mxu0 0.0
      %1561 = vmatprep.mubr.f32.mxu0 0.0
      %1562 = vmatmul.mubr.f32.gmra.mrb[0].mxu0 %v1353
      %v1563 = vpop.f32.mrb[0].mxu0
      %v1564 = vadd.f32 %v1350, %v1563
      %v1565 = vpop.f32.mrb[0].mxu0
      %v1566 = vadd.f32 %v1350, %v1565
      %1567 = vdwg.mxu0
      %1568 = vmatprep.subr.mxu0 %v1121
      %1569 = vmatpush1.msra.mxu0 %v1120
      %1570 = vmatprep.subr.mxu0 %v1153
      %1571 = vmatpush1.msra.mxu0 %v1152
      %1572 = vmatprep.subr.mxu0 %v1185
      %1573 = vmatpush1.msra.mxu0 %v1184
      %1574 = vmatprep.subr.mxu0 %v1217
      %1575 = vmatpush1.msra.mxu0 %v1216
      %1576 = vmatprep.subr.mxu0 %v1088
      %1577 = vmatpush1.msra.mxu0 %v1087
      %1578 = vmatprep.subr.mxu0 %v1249
      %1579 = vmatpush1.msra.mxu0 %v1248
      %1580 = vmatprep.subr.mxu0 %v1281
      %1581 = vmatpush1.msra.mxu0 %v1280
      %1582 = vmatprep.subr.mxu0 %v1313
      %1583 = vmatpush1.msra.mxu0 %v1312
      %1584 = vmatprep.subr.mxu0 %v1345
      %1585 = vmatpush1.msra.mxu0 %v1344
      %1586 = vmatprep.subr.mxu0 0.0
      %1587 = vmatpush1.msra.mxu0 0.0
      %1588 = vmatprep.subr.mxu0 0.0
      %1589 = vmatpush1.msra.mxu0 0.0
      %1590 = vmatprep.subr.mxu0 0.0
      %1591 = vmatpush1.msra.mxu0 0.0
      %1592 = vmatprep.subr.mxu0 0.0
      %1593 = vmatpush1.msra.mxu0 0.0
      %1594 = vmatprep.subr.mxu0 0.0
      %1595 = vmatpush1.msra.mxu0 0.0
      %1596 = vmatprep.subr.mxu0 0.0
      %1597 = vmatpush1.msra.mxu0 0.0
      %1598 = vmatprep.subr.mxu0 0.0
      %1599 = vmatpush1.msra.mxu0 0.0
      %1600 = vmatprep.subr.mxu0 0.0
      %1601 = vmatpush1.msra.mxu0 0.0
      %1602 = vmatprep.subr.mxu0 0.0
      %1603 = vmatpush1.msra.mxu0 0.0
      %1604 = vmatprep.subr.mxu0 0.0
      %1605 = vmatpush1.msra.mxu0 0.0
      %1606 = vmatprep.subr.mxu0 0.0
      %1607 = vmatpush1.msra.mxu0 0.0
      %1608 = vmatprep.subr.mxu0 0.0
      %1609 = vmatpush1.msra.mxu0 0.0
      %1610 = vmatprep.subr.mxu0 0.0
      %1611 = vmatpush1.msra.mxu0 0.0
      %1612 = vmatprep.subr.mxu0 0.0
      %1613 = vmatpush1.msra.mxu0 0.0
      %1614 = vmatprep.subr.mxu0 0.0
      %1615 = vmatpush1.msra.mxu0 0.0
      %1616 = vmatprep.subr.mxu0 0.0
      %1617 = vmatpush1.msra.mxu0 0.0
      %1618 = vmatprep.subr.mxu0 0.0
      %1619 = vmatpush1.msra.mxu0 0.0
      %1620 = vmatprep.subr.mxu0 0.0
      %1621 = vmatpush1.msra.mxu0 0.0
      %1622 = vmatprep.subr.mxu0 0.0
      %1623 = vmatpush1.msra.mxu0 0.0
      %1624 = vmatprep.subr.mxu0 0.0
      %1625 = vmatpush1.msra.mxu0 0.0
      %1626 = vmatprep.subr.mxu0 0.0
      %1627 = vmatpush1.msra.mxu0 0.0
      %1628 = vmatprep.subr.mxu0 0.0
      %1629 = vmatpush1.msra.mxu0 0.0
      %1630 = vmatprep.subr.mxu0 0.0
      %1631 = vmatpush1.msra.mxu0 0.0
      %1632 = vmatprep.mubr.f32.mxu0 0.0
      %1633 = vmatmul.mubr.f32.gmra.mrb[0].mxu0 %v1353
      %v1634 = vpop.f32.mrb[0].mxu0
      %v1635 = vadd.f32 %v1350, %v1634
      %v1636 = vpop.f32.mrb[0].mxu0
      %v1637 = vadd.f32 %v1350, %v1636
      %1638 = vdwg.mxu0
      %v1639 = vmax.f32 %v1422, 0.0
      %v1640 = vmax.f32 %v1424, 0.0
      %v1641 = vmax.f32 %v1493, 0.0
      %v1642 = vmax.f32 %v1495, 0.0
      %v1643 = vmax.f32 %v1564, 0.0
      %v1644 = vmax.f32 %v1566, 0.0
      %v1645 = vmax.f32 %v1635, 0.0
      %v1646 = vmax.f32 %v1637, 0.0
      %1647 = vst [vmem:[%s271] sm:$0xff] %v1639
      %1648 = vst [vmem:[%s271 + $0x8] sm:$0xff] %v1640
      %1649 = vst [vmem:[%s271 + $0x10] sm:$0xff] %v1641
      %1650 = vst [vmem:[%s271 + $0x18] sm:$0xff] %v1642
      %1651 = vst [vmem:[%s271 + $0x20] sm:$0xff] %v1643
      %1652 = vst [vmem:[%s271 + $0x28] sm:$0xff] %v1644
      %1653 = vst [vmem:[%s271 + $0x30] sm:$0xff] %v1645
      %1654 = vst [vmem:[%s271 + $0x38] sm:$0xff] %v1646
      %p1655 = scmp.lt.s32.totalorder %s17, 1
      %s1656 = scalar_select %p1655, %s17, 1
      %s1657 = smul.addr %s1656, 8
      %s1658 = smul.addr %s1657, 8
      %s1659 = scalar_lea.vmem %s6, %s1658
      // Predicated region
      $region45: #{conv_block_up.3} parent=43 // pred_check
        %p1660 = pneg %p171
      $region46: #{conv_block_up.3} parent=43 // pred_check_branch
        %1662 = sbr.rel (%p1660) target = $region48
      $region47: #{conv_block_up.3} parent=43 // pred_region
        _
      $region48: #{conv_block_up.3} parent=43 // pred_fallthru
        _
    $region44: #{conv_block_up.3} parent=5 // pred_fallthru
      _
    %p1663 = scmp.le.s32.totalorder 2, %s12
    // Predicated region
    $region49: #{conv_block_up.3} parent=5 // pred_check
      %p1664 = pneg %p1663
    $region50: #{conv_block_up.3} parent=5 // pred_check_branch
      %1666 = sbr.rel (%p1664) target = $region52
    $region51: #{conv_block_up.3} parent=5 // pred_region
      %s1667 = ssub.s32 %s12, 2
      // Predicated region
      $region53: #{conv_block_up.3} parent=51 // pred_check
        %p1668 = pneg %p177
      $region54: #{conv_block_up.3} parent=51 // pred_check_branch
        %1670 = sbr.rel (%p1668) target = $region56
      $region55: #{conv_block_up.3} parent=51 // pred_region
        %p1671 = scmp.lt.s32.totalorder %s18, 1
        %s1672 = scalar_select %p1671, %s18, 1
        %s1673 = smul.addr %s1672, 8
        %s1674 = smul.addr %s1673, 8
        %s1675 = scalar_lea.vmem %s6, %s1674
      $region56: #{conv_block_up.3} parent=51 // pred_fallthru
        _
    $region52: #{conv_block_up.3} parent=5 // pred_fallthru
      _
  $region6: #{conv_block_up.3} parent=0 // loop_footer
    %s16 = sadd.s32 1, %s12
  $region7: #{conv_block_up.3} parent=0 // loop_footer_branch
    %11 = sbr.rel target = $region3
  $region8: #{conv_block_up.3} parent=0 // loop_exit
    _

</llo_original>
